<compile_context>
chip_gen: v7x
topology: tpu7x:2x2x1
jax: 0.10.0
libtpu: 0.0.40
codegen_flags: <defaults>
</compile_context>

<pallas_src>
import functools
import math

import jax
import jax.numpy as jnp
from jax.experimental import pallas as pl
from jax.experimental.pallas import tpu as pltpu

F32 = jnp.float32
BF16 = jnp.bfloat16


# ---------------------------------------------------------------------------
# Pallas kernels
# ---------------------------------------------------------------------------

def _attn_block_kernel(x_ref, mask_ref, bias_ref, wqkv_ref, wo_ref, g_ref,
                       o_ref, *, nh, eps):
    """Fused T5 self-attention sub-block for one batch element.

    x_ref    : [S, H]          activations (bf16) -- residual input
    mask_ref : [1, 1, S]       key validity mask (f32, 1 = real token)
    bias_ref : [nh, S, S]      relative position bias (f32)
    wqkv_ref : [3, nh, H, dh]  stacked per-head q/k/v projections (bf16)
    wo_ref   : [nh, dh, H]     output projection, head-blocked rows (bf16)
    g_ref    : [1, H]          RMSNorm weight (f32)
    o_ref    : [S, H]          x + SelfAttention(RMSNorm(x))
    """
    x = x_ref[...].astype(F32)                                   # [S, H]

    # T5LayerNorm: RMS only, no mean / no bias
    var = jnp.mean(x * x, axis=-1, keepdims=True)
    xn = (x * jax.lax.rsqrt(var + eps) * g_ref[...]).astype(BF16)

    # additive key mask built in-kernel (0 valid, -1e9 pad)
    add_mask = (1.0 - mask_ref[0]) * jnp.float32(-1e9)           # [1, S]

    acc = jnp.zeros_like(x)                                      # [S, H] f32
    for h in range(nh):                                          # static unroll
        q = jnp.dot(xn, wqkv_ref[0, h], preferred_element_type=F32)   # [S, dh]
        k = jnp.dot(xn, wqkv_ref[1, h], preferred_element_type=F32)
        v = jnp.dot(xn, wqkv_ref[2, h], preferred_element_type=F32)

        # T5 does NOT scale logits by 1/sqrt(dh)
        s = jax.lax.dot_general(q, k, (((1,), (1,)), ((), ())),
                                preferred_element_type=F32)      # [S, S]
        s = s + bias_ref[h] + add_mask
        s = s - jnp.max(s, axis=-1, keepdims=True)
        p = jnp.exp(s)
        p = p * pl.reciprocal(jnp.sum(p, axis=-1, keepdims=True), approx=True)

        ctx = jnp.dot(p, v, preferred_element_type=F32)          # [S, dh]
        # ctx @ Wo  ==  sum_h ctx_h @ Wo[h*dh:(h+1)*dh, :]
        acc = acc + jnp.dot(ctx.astype(BF16), wo_ref[h],
                            preferred_element_type=F32)          # [S, H]

    o_ref[...] = (x + acc).astype(o_ref.dtype)


def _ffn_block_kernel(x_ref, g_ref, wi_ref, wo_ref, o_ref, *, eps):
    """Fused T5 DenseReluDense sub-block over a row tile.

    x_ref : [TM, H] (bf16), g_ref : [1, H] (f32)
    wi_ref: [H, F] (bf16),  wo_ref: [F, H] (bf16)
    """
    x = x_ref[...].astype(F32)
    var = jnp.mean(x * x, axis=-1, keepdims=True)
    xn = (x * jax.lax.rsqrt(var + eps) * g_ref[...]).astype(BF16)

    h = jnp.dot(xn, wi_ref[...], preferred_element_type=F32)
    h = jnp.maximum(h, 0.0)                                      # t5-base: ReLU
    y = jnp.dot(h.astype(BF16), wo_ref[...], preferred_element_type=F32)

    o_ref[...] = (x + y).astype(o_ref.dtype)


def _rmsnorm_kernel(x_ref, g_ref, o_ref, *, eps):
    """Final T5 RMSNorm (no residual, no zero tensor streamed)."""
    x = x_ref[...].astype(F32)
    var = jnp.mean(x * x, axis=-1, keepdims=True)
    o_ref[...] = (x * jax.lax.rsqrt(var + eps) * g_ref[...]).astype(o_ref.dtype)


# ---------------------------------------------------------------------------
# pallas_call wrappers
# ---------------------------------------------------------------------------

def _cparams():
    return pltpu.CompilerParams(
        dimension_semantics=("parallel",),          # shard across TCs on v7x
        vmem_limit_bytes=32 * 1024 * 1024,
    )


def attn_block(x2d, key_mask, pos_bias, wqkv, wo, ln_g, *, B, S, nh, dh, eps):
    H = nh * dh
    flops = B * (2 * S * H * 3 * H + 4 * S * S * H + 2 * S * H * H)
    bytes_acc = (2 * 2 * B * S * H                       # x in + out (bf16)
                 + 2 * (3 * H * H + H * H)               # weights (bf16)
                 + 4 * (nh * S * S + B * S + H))         # bias + mask + ln (f32)
    return pl.pallas_call(
        functools.partial(_attn_block_kernel, nh=nh, eps=eps),
        grid=(B,),
        in_specs=[
            pl.BlockSpec((S, H), lambda b: (b, 0)),              # x rows of batch b
            pl.BlockSpec((1, 1, S), lambda b: (b, 0, 0)),        # key mask
            pl.BlockSpec((nh, S, S), lambda b: (0, 0, 0)),       # rel-pos bias
            pl.BlockSpec((3, nh, H, dh), lambda b: (0, 0, 0, 0)),
            pl.BlockSpec((nh, dh, H), lambda b: (0, 0, 0)),
            pl.BlockSpec((1, H), lambda b: (0, 0)),
        ],
        out_specs=pl.BlockSpec((S, H), lambda b: (b, 0)),
        out_shape=jax.ShapeDtypeStruct((B * S, H), x2d.dtype),
        compiler_params=_cparams(),
        cost_estimate=pl.CostEstimate(flops=flops,
                                      transcendentals=B * nh * S * S,
                                      bytes_accessed=bytes_acc),
    )(x2d, key_mask, pos_bias, wqkv, wo, ln_g)


def ffn_block(x2d, ln_g, wi, wo, *, tm, eps):
    M, H = x2d.shape
    dff = wi.shape[1]
    flops = M * (2 * H * dff + 2 * dff * H)
    bytes_acc = 2 * 2 * M * H + 2 * 2 * H * dff + 4 * H
    return pl.pallas_call(
        functools.partial(_ffn_block_kernel, eps=eps),
        grid=(M // tm,),
        in_specs=[
            pl.BlockSpec((tm, H), lambda i: (i, 0)),
            pl.BlockSpec((1, H), lambda i: (0, 0)),
            pl.BlockSpec((H, dff), lambda i: (0, 0)),     # weights stay resident
            pl.BlockSpec((dff, H), lambda i: (0, 0)),
        ],
        out_specs=pl.BlockSpec((tm, H), lambda i: (i, 0)),
        out_shape=jax.ShapeDtypeStruct((M, H), x2d.dtype),
        compiler_params=_cparams(),
        cost_estimate=pl.CostEstimate(flops=flops, transcendentals=0,
                                      bytes_accessed=bytes_acc),
    )(x2d, ln_g, wi, wo)


def final_rmsnorm(x2d, ln_g, *, tm, eps):
    M, H = x2d.shape
    return pl.pallas_call(
        functools.partial(_rmsnorm_kernel, eps=eps),
        grid=(M // tm,),
        in_specs=[pl.BlockSpec((tm, H), lambda i: (i, 0)),
                  pl.BlockSpec((1, H), lambda i: (0, 0))],
        out_specs=pl.BlockSpec((tm, H), lambda i: (i, 0)),
        out_shape=jax.ShapeDtypeStruct((M, H), F32),
        compiler_params=_cparams(),
    )(x2d, ln_g)


# ---------------------------------------------------------------------------
# T5 relative position bias (tiny, data-independent -> computed once in XLA)
# ---------------------------------------------------------------------------

def _relative_position_bucket(relative_position, num_buckets, max_distance):
    # bidirectional bucketing (HF T5 encoder)
    num_buckets = num_buckets // 2
    rel_buckets = jnp.where(relative_position > 0, num_buckets, 0)
    rp = jnp.abs(relative_position)
    max_exact = num_buckets // 2
    is_small = rp < max_exact
    rp_large = max_exact + (
        jnp.log(jnp.maximum(rp, 1).astype(F32) / max_exact)
        / math.log(max_distance / max_exact)
        * (num_buckets - max_exact)
    ).astype(jnp.int32)
    rp_large = jnp.minimum(rp_large, num_buckets - 1)
    return rel_buckets + jnp.where(is_small, rp, rp_large)


def relative_position_bias(table, S, num_buckets, max_distance):
    ctx_pos = jnp.arange(S)[:, None]
    mem_pos = jnp.arange(S)[None, :]
    rel_pos = mem_pos - ctx_pos                                  # [S, S]
    buckets = _relative_position_bucket(rel_pos, num_buckets, max_distance)
    values = jnp.take(table, buckets, axis=0)                    # [S, S, nh]
    return jnp.transpose(values, (2, 0, 1)).astype(F32)          # [nh, S, S]


# ---------------------------------------------------------------------------
# Synthetic T5 config + deterministic parameter init
# ---------------------------------------------------------------------------

CFG = dict(
    vocab_size=64,
    hidden=32,
    n_heads=4,
    n_layers=2,
    d_ff=64,
    num_buckets=32,
    rel_max_distance=128,
    pad_id=0,          # T5 pad token id
    ln_eps=1e-6,       # T5 layer-norm epsilon
)


def init_params(key, cfg):
    H, dff = cfg["hidden"], cfg["d_ff"]
    nh = cfg["n_heads"]
    dh = H // nh
    keys = jax.random.split(key, 2 + cfg["n_layers"])

    def w(k, shape):
        return (0.02 * jax.random.normal(k, shape, dtype=F32)).astype(BF16)

    params = {
        "word_emb": w(keys[0], (cfg["vocab_size"], H)),
        # relative attention bias table (layer-0-only in HF, shared by all layers)
        "rel_bias": 0.1 * jax.random.normal(keys[1], (cfg["num_buckets"], nh),
                                            dtype=F32),
        "final_ln": jnp.ones((1, H), F32),
        "layers": [],
    }
    for li in range(cfg["n_layers"]):
        lk = jax.random.split(keys[2 + li], 4)
        params["layers"].append({
            "ln1": jnp.ones((1, H), F32),
            "wqkv": w(lk[0], (3, nh, H, dh)),   # stacked per-head q/k/v
            "wo": w(lk[1], (nh, dh, H)),        # head-blocked output proj
            "ln2": jnp.ones((1, H), F32),
            "wi": w(lk[2], (H, dff)),
            "wo2": w(lk[3], (dff, H)),
        })
    return params


# ---------------------------------------------------------------------------
# T5Encoder.forward equivalent: token_ids -> (cont_reps, token_ids)
# ---------------------------------------------------------------------------

def t5_encoder_forward(params, token_ids, cfg=CFG):
    B, S = token_ids.shape
    H = cfg["hidden"]
    nh = cfg["n_heads"]
    dh = H // nh
    eps = cfg["ln_eps"]

    # (token_ids != pad) mask, passed to kernels as a tiny [B, 1, S] tensor
    attn_mask = (token_ids != cfg["pad_id"]).astype(F32)         # [B, S]
    key_mask = attn_mask.reshape(B, 1, S)

    # embedding gather stays in XLA (data-dependent gather, tiny)
    x2d = jnp.take(params["word_emb"], token_ids, axis=0).reshape(B * S, H)

    # relative position bias, shared across layers
    pos_bias = relative_position_bias(params["rel_bias"], S,
                                      cfg["num_buckets"],
                                      cfg["rel_max_distance"])   # [nh, S, S]

    tm = min(8, B * S)
    for lyr in params["layers"]:
        x2d = attn_block(x2d, key_mask, pos_bias, lyr["wqkv"], lyr["wo"],
                         lyr["ln1"], B=B, S=S, nh=nh, dh=dh, eps=eps)
        x2d = ffn_block(x2d, lyr["ln2"], lyr["wi"], lyr["wo2"], tm=tm, eps=eps)

    x2d = final_rmsnorm(x2d, params["final_ln"], tm=tm, eps=eps)
    cont_reps = x2d.reshape(B, S, H)
    return cont_reps, token_ids


# ---------------------------------------------------------------------------
# Main
# ---------------------------------------------------------------------------

if __name__ == "__main__":
    key = jax.random.PRNGKey(0)
    pkey, tkey = jax.random.split(key)

    params = init_params(pkey, CFG)

    B, S = 2, 8
    token_ids = jax.random.randint(tkey, (B, S), 2, CFG["vocab_size"],
                                   dtype=jnp.int32)
    token_ids = token_ids.at[:, -1].set(1)                # </s>
    token_ids = token_ids.at[1, 5:].set(CFG["pad_id"])    # pad tail of sentence 2

    cont_reps, out_ids = jax.jit(t5_encoder_forward)(params, token_ids)
    jax.block_until_ready(cont_reps)
    jax.block_until_ready(out_ids)

    assert cont_reps.shape == (B, S, CFG["hidden"])
    assert out_ids.shape == (B, S)
    assert bool(jnp.all(jnp.isfinite(cont_reps)))
    print("KERNEL_OK")
</pallas_src>

<mosaic_0001>
module attributes {stable_mosaic.version = 11 : i64} {
  func.func @_attn_block_kernel(%arg0: i32, %arg1: memref<8x32xbf16, #tpu.memory_space<vmem>>, %arg2: memref<1x1x8xf32, #tpu.memory_space<vmem>>, %arg3: memref<4x8x8xf32, #tpu.memory_space<vmem>>, %arg4: memref<3x4x32x8xbf16, #tpu.memory_space<vmem>>, %arg5: memref<4x8x32xbf16, #tpu.memory_space<vmem>>, %arg6: memref<1x32xf32, #tpu.memory_space<vmem>>, %arg7: memref<8x32xbf16, #tpu.memory_space<vmem>>) attributes {dimension_semantics = [#tpu.dimension_semantics<parallel>], iteration_bounds = array<i64: 2>, scalar_prefetch = 0 : i64, scratch_operands = 0 : i64, tpu.core_type = #tpu.core_type<tc>, window_params = [{transform_indices = @transform_0, window_bounds = array<i64: 8, 32>}, {transform_indices = @transform_1, window_bounds = array<i64: 1, 1, 8>}, {pipeline_mode = #tpu.pipeline_mode<synchronous>, transform_indices = @transform_2, window_bounds = array<i64: 4, 8, 8>}, {pipeline_mode = #tpu.pipeline_mode<synchronous>, transform_indices = @transform_3, window_bounds = array<i64: 3, 4, 32, 8>}, {pipeline_mode = #tpu.pipeline_mode<synchronous>, transform_indices = @transform_4, window_bounds = array<i64: 4, 8, 32>}, {pipeline_mode = #tpu.pipeline_mode<synchronous>, transform_indices = @transform_5, window_bounds = array<i64: 1, 32>}, {transform_indices = @transform_6, window_bounds = array<i64: 8, 32>}]} {
    %c0 = arith.constant 0 : index
    %c0_0 = arith.constant 0 : index
    %0 = vector.load %arg1[%c0, %c0_0] : memref<8x32xbf16, #tpu.memory_space<vmem>>, vector<8x32xbf16>
    %1 = arith.extf %0 : vector<8x32xbf16> to vector<8x32xf32>
    %2 = arith.mulf %1, %1 : vector<8x32xf32>
    %cst = arith.constant dense<0.000000e+00> : vector<8xf32>
    %3 = vector.multi_reduction <add>, %2, %cst [1] : vector<8x32xf32> to vector<8xf32>
    %4 = vector.shape_cast %3 : vector<8xf32> to vector<8x1xf32>
    %cst_1 = arith.constant 3.200000e+01 : f32
    %5 = vector.broadcast %cst_1 : f32 to vector<8x1xf32>
    %6 = arith.divf %4, %5 : vector<8x1xf32>
    %cst_2 = arith.constant 9.99999997E-7 : f32
    %7 = vector.broadcast %cst_2 : f32 to vector<8x1xf32>
    %8 = arith.addf %6, %7 : vector<8x1xf32>
    %9 = math.rsqrt %8 : vector<8x1xf32>
    %10 = vector.broadcast %9 : vector<8x1xf32> to vector<8x32xf32>
    %11 = arith.mulf %1, %10 : vector<8x32xf32>
    %c0_3 = arith.constant 0 : index
    %c0_4 = arith.constant 0 : index
    %12 = vector.load %arg6[%c0_3, %c0_4] : memref<1x32xf32, #tpu.memory_space<vmem>>, vector<1x32xf32>
    %13 = vector.broadcast %12 : vector<1x32xf32> to vector<8x32xf32>
    %14 = arith.mulf %11, %13 : vector<8x32xf32>
    %15 = arith.truncf %14 : vector<8x32xf32> to vector<8x32xbf16>
    %c0_5 = arith.constant 0 : index
    %c0_6 = arith.constant 0 : index
    %c0_7 = arith.constant 0 : index
    %16 = vector.load %arg2[%c0_5, %c0_6, %c0_7] : memref<1x1x8xf32, #tpu.memory_space<vmem>>, vector<1x1x8xf32>
    %17 = vector.shape_cast %16 : vector<1x1x8xf32> to vector<1x8xf32>
    %cst_8 = arith.constant 1.000000e+00 : f32
    %18 = vector.broadcast %cst_8 : f32 to vector<1x8xf32>
    %19 = arith.subf %18, %17 : vector<1x8xf32>
    %cst_9 = arith.constant -1.000000e+09 : f32
    %20 = vector.broadcast %cst_9 : f32 to vector<1x8xf32>
    %21 = arith.mulf %19, %20 : vector<1x8xf32>
    %cst_10 = arith.constant 0.000000e+00 : f32
    %22 = vector.broadcast %cst_10 : f32 to vector<8x32xf32>
    %c0_11 = arith.constant 0 : index
    %c0_12 = arith.constant 0 : index
    %c0_13 = arith.constant 0 : index
    %c0_14 = arith.constant 0 : index
    %23 = vector.load %arg4[%c0_11, %c0_12, %c0_13, %c0_14] : memref<3x4x32x8xbf16, #tpu.memory_space<vmem>>, vector<1x1x32x8xbf16>
    %24 = vector.shape_cast %23 : vector<1x1x32x8xbf16> to vector<32x8xbf16>
    %cst_15 = arith.constant dense<0.000000e+00> : vector<8x8xf32>
    %25 = tpu.matmul %15, %24, %cst_15 {dimension_numbers = #tpu.dot_dimension_numbers<[1], [0], [0], [1], [0, 0, 1, 1], [], []>} : vector<8x32xbf16>, vector<32x8xbf16>, vector<8x8xf32> -> vector<8x8xf32>
    %c1 = arith.constant 1 : index
    %c0_16 = arith.constant 0 : index
    %c0_17 = arith.constant 0 : index
    %c0_18 = arith.constant 0 : index
    %26 = vector.load %arg4[%c1, %c0_16, %c0_17, %c0_18] : memref<3x4x32x8xbf16, #tpu.memory_space<vmem>>, vector<1x1x32x8xbf16>
    %27 = vector.shape_cast %26 : vector<1x1x32x8xbf16> to vector<32x8xbf16>
    %cst_19 = arith.constant dense<0.000000e+00> : vector<8x8xf32>
    %28 = tpu.matmul %15, %27, %cst_19 {dimension_numbers = #tpu.dot_dimension_numbers<[1], [0], [0], [1], [0, 0, 1, 1], [], []>} : vector<8x32xbf16>, vector<32x8xbf16>, vector<8x8xf32> -> vector<8x8xf32>
    %c2 = arith.constant 2 : index
    %c0_20 = arith.constant 0 : index
    %c0_21 = arith.constant 0 : index
    %c0_22 = arith.constant 0 : index
    %29 = vector.load %arg4[%c2, %c0_20, %c0_21, %c0_22] : memref<3x4x32x8xbf16, #tpu.memory_space<vmem>>, vector<1x1x32x8xbf16>
    %30 = vector.shape_cast %29 : vector<1x1x32x8xbf16> to vector<32x8xbf16>
    %cst_23 = arith.constant dense<0.000000e+00> : vector<8x8xf32>
    %31 = tpu.matmul %15, %30, %cst_23 {dimension_numbers = #tpu.dot_dimension_numbers<[1], [0], [0], [1], [0, 0, 1, 1], [], []>} : vector<8x32xbf16>, vector<32x8xbf16>, vector<8x8xf32> -> vector<8x8xf32>
    %cst_24 = arith.constant dense<0.000000e+00> : vector<8x8xf32>
    %32 = tpu.matmul %25, %28, %cst_24 {dimension_numbers = #tpu.dot_dimension_numbers<[1], [1], [0], [0], [0, 0, 1, 0], [], []>} : vector<8x8xf32>, vector<8x8xf32>, vector<8x8xf32> -> vector<8x8xf32>
    %c0_25 = arith.constant 0 : index
    %c0_26 = arith.constant 0 : index
    %c0_27 = arith.constant 0 : index
    %33 = vector.load %arg3[%c0_25, %c0_26, %c0_27] : memref<4x8x8xf32, #tpu.memory_space<vmem>>, vector<1x8x8xf32>
    %34 = vector.shape_cast %33 : vector<1x8x8xf32> to vector<8x8xf32>
    %35 = arith.addf %32, %34 : vector<8x8xf32>
    %36 = vector.broadcast %21 : vector<1x8xf32> to vector<8x8xf32>
    %37 = arith.addf %35, %36 : vector<8x8xf32>
    %cst_28 = arith.constant dense<0xFF800000> : vector<8xf32>
    %38 = vector.multi_reduction <maximumf>, %37, %cst_28 [1] : vector<8x8xf32> to vector<8xf32>
    %39 = vector.shape_cast %38 : vector<8xf32> to vector<8x1xf32>
    %40 = vector.broadcast %39 : vector<8x1xf32> to vector<8x8xf32>
    %41 = arith.subf %37, %40 : vector<8x8xf32>
    %42 = math.exp %41 : vector<8x8xf32>
    %cst_29 = arith.constant dense<0.000000e+00> : vector<8xf32>
    %43 = vector.multi_reduction <add>, %42, %cst_29 [1] : vector<8x8xf32> to vector<8xf32>
    %44 = vector.shape_cast %43 : vector<8xf32> to vector<8x1xf32>
    %45 = tpu.reciprocal %44 {approx = true} : vector<8x1xf32> -> vector<8x1xf32>
    %46 = vector.broadcast %45 : vector<8x1xf32> to vector<8x8xf32>
    %47 = arith.mulf %42, %46 : vector<8x8xf32>
    %cst_30 = arith.constant dense<0.000000e+00> : vector<8x8xf32>
    %48 = tpu.matmul %47, %31, %cst_30 {dimension_numbers = #tpu.dot_dimension_numbers<[1], [0], [0], [1], [0, 0, 1, 1], [], []>} : vector<8x8xf32>, vector<8x8xf32>, vector<8x8xf32> -> vector<8x8xf32>
    %49 = arith.truncf %48 : vector<8x8xf32> to vector<8x8xbf16>
    %c0_31 = arith.constant 0 : index
    %c0_32 = arith.constant 0 : index
    %c0_33 = arith.constant 0 : index
    %50 = vector.load %arg5[%c0_31, %c0_32, %c0_33] : memref<4x8x32xbf16, #tpu.memory_space<vmem>>, vector<1x8x32xbf16>
    %51 = vector.shape_cast %50 : vector<1x8x32xbf16> to vector<8x32xbf16>
    %cst_34 = arith.constant dense<0.000000e+00> : vector<8x32xf32>
    %52 = tpu.matmul %49, %51, %cst_34 {dimension_numbers = #tpu.dot_dimension_numbers<[1], [0], [0], [1], [0, 0, 1, 1], [], []>} : vector<8x8xbf16>, vector<8x32xbf16>, vector<8x32xf32> -> vector<8x32xf32>
    %53 = arith.addf %22, %52 : vector<8x32xf32>
    %c0_35 = arith.constant 0 : index
    %c1_36 = arith.constant 1 : index
    %c0_37 = arith.constant 0 : index
    %c0_38 = arith.constant 0 : index
    %54 = vector.load %arg4[%c0_35, %c1_36, %c0_37, %c0_38] : memref<3x4x32x8xbf16, #tpu.memory_space<vmem>>, vector<1x1x32x8xbf16>
    %55 = vector.shape_cast %54 : vector<1x1x32x8xbf16> to vector<32x8xbf16>
    %cst_39 = arith.constant dense<0.000000e+00> : vector<8x8xf32>
    %56 = tpu.matmul %15, %55, %cst_39 {dimension_numbers = #tpu.dot_dimension_numbers<[1], [0], [0], [1], [0, 0, 1, 1], [], []>} : vector<8x32xbf16>, vector<32x8xbf16>, vector<8x8xf32> -> vector<8x8xf32>
    %c1_40 = arith.constant 1 : index
    %c1_41 = arith.constant 1 : index
    %c0_42 = arith.constant 0 : index
    %c0_43 = arith.constant 0 : index
    %57 = vector.load %arg4[%c1_40, %c1_41, %c0_42, %c0_43] : memref<3x4x32x8xbf16, #tpu.memory_space<vmem>>, vector<1x1x32x8xbf16>
    %58 = vector.shape_cast %57 : vector<1x1x32x8xbf16> to vector<32x8xbf16>
    %cst_44 = arith.constant dense<0.000000e+00> : vector<8x8xf32>
    %59 = tpu.matmul %15, %58, %cst_44 {dimension_numbers = #tpu.dot_dimension_numbers<[1], [0], [0], [1], [0, 0, 1, 1], [], []>} : vector<8x32xbf16>, vector<32x8xbf16>, vector<8x8xf32> -> vector<8x8xf32>
    %c2_45 = arith.constant 2 : index
    %c1_46 = arith.constant 1 : index
    %c0_47 = arith.constant 0 : index
    %c0_48 = arith.constant 0 : index
    %60 = vector.load %arg4[%c2_45, %c1_46, %c0_47, %c0_48] : memref<3x4x32x8xbf16, #tpu.memory_space<vmem>>, vector<1x1x32x8xbf16>
    %61 = vector.shape_cast %60 : vector<1x1x32x8xbf16> to vector<32x8xbf16>
    %cst_49 = arith.constant dense<0.000000e+00> : vector<8x8xf32>
    %62 = tpu.matmul %15, %61, %cst_49 {dimension_numbers = #tpu.dot_dimension_numbers<[1], [0], [0], [1], [0, 0, 1, 1], [], []>} : vector<8x32xbf16>, vector<32x8xbf16>, vector<8x8xf32> -> vector<8x8xf32>
    %cst_50 = arith.constant dense<0.000000e+00> : vector<8x8xf32>
    %63 = tpu.matmul %56, %59, %cst_50 {dimension_numbers = #tpu.dot_dimension_numbers<[1], [1], [0], [0], [0, 0, 1, 0], [], []>} : vector<8x8xf32>, vector<8x8xf32>, vector<8x8xf32> -> vector<8x8xf32>
    %c1_51 = arith.constant 1 : index
    %c0_52 = arith.constant 0 : index
    %c0_53 = arith.constant 0 : index
    %64 = vector.load %arg3[%c1_51, %c0_52, %c0_53] : memref<4x8x8xf32, #tpu.memory_space<vmem>>, vector<1x8x8xf32>
    %65 = vector.shape_cast %64 : vector<1x8x8xf32> to vector<8x8xf32>
    %66 = arith.addf %63, %65 : vector<8x8xf32>
    %67 = vector.broadcast %21 : vector<1x8xf32> to vector<8x8xf32>
    %68 = arith.addf %66, %67 : vector<8x8xf32>
    %cst_54 = arith.constant dense<0xFF800000> : vector<8xf32>
    %69 = vector.multi_reduction <maximumf>, %68, %cst_54 [1] : vector<8x8xf32> to vector<8xf32>
    %70 = vector.shape_cast %69 : vector<8xf32> to vector<8x1xf32>
    %71 = vector.broadcast %70 : vector<8x1xf32> to vector<8x8xf32>
    %72 = arith.subf %68, %71 : vector<8x8xf32>
    %73 = math.exp %72 : vector<8x8xf32>
    %cst_55 = arith.constant dense<0.000000e+00> : vector<8xf32>
    %74 = vector.multi_reduction <add>, %73, %cst_55 [1] : vector<8x8xf32> to vector<8xf32>
    %75 = vector.shape_cast %74 : vector<8xf32> to vector<8x1xf32>
    %76 = tpu.reciprocal %75 {approx = true} : vector<8x1xf32> -> vector<8x1xf32>
    %77 = vector.broadcast %76 : vector<8x1xf32> to vector<8x8xf32>
    %78 = arith.mulf %73, %77 : vector<8x8xf32>
    %cst_56 = arith.constant dense<0.000000e+00> : vector<8x8xf32>
    %79 = tpu.matmul %78, %62, %cst_56 {dimension_numbers = #tpu.dot_dimension_numbers<[1], [0], [0], [1], [0, 0, 1, 1], [], []>} : vector<8x8xf32>, vector<8x8xf32>, vector<8x8xf32> -> vector<8x8xf32>
    %80 = arith.truncf %79 : vector<8x8xf32> to vector<8x8xbf16>
    %c1_57 = arith.constant 1 : index
    %c0_58 = arith.constant 0 : index
    %c0_59 = arith.constant 0 : index
    %81 = vector.load %arg5[%c1_57, %c0_58, %c0_59] : memref<4x8x32xbf16, #tpu.memory_space<vmem>>, vector<1x8x32xbf16>
    %82 = vector.shape_cast %81 : vector<1x8x32xbf16> to vector<8x32xbf16>
    %cst_60 = arith.constant dense<0.000000e+00> : vector<8x32xf32>
    %83 = tpu.matmul %80, %82, %cst_60 {dimension_numbers = #tpu.dot_dimension_numbers<[1], [0], [0], [1], [0, 0, 1, 1], [], []>} : vector<8x8xbf16>, vector<8x32xbf16>, vector<8x32xf32> -> vector<8x32xf32>
    %84 = arith.addf %53, %83 : vector<8x32xf32>
    %c0_61 = arith.constant 0 : index
    %c2_62 = arith.constant 2 : index
    %c0_63 = arith.constant 0 : index
    %c0_64 = arith.constant 0 : index
    %85 = vector.load %arg4[%c0_61, %c2_62, %c0_63, %c0_64] : memref<3x4x32x8xbf16, #tpu.memory_space<vmem>>, vector<1x1x32x8xbf16>
    %86 = vector.shape_cast %85 : vector<1x1x32x8xbf16> to vector<32x8xbf16>
    %cst_65 = arith.constant dense<0.000000e+00> : vector<8x8xf32>
    %87 = tpu.matmul %15, %86, %cst_65 {dimension_numbers = #tpu.dot_dimension_numbers<[1], [0], [0], [1], [0, 0, 1, 1], [], []>} : vector<8x32xbf16>, vector<32x8xbf16>, vector<8x8xf32> -> vector<8x8xf32>
    %c1_66 = arith.constant 1 : index
    %c2_67 = arith.constant 2 : index
    %c0_68 = arith.constant 0 : index
    %c0_69 = arith.constant 0 : index
    %88 = vector.load %arg4[%c1_66, %c2_67, %c0_68, %c0_69] : memref<3x4x32x8xbf16, #tpu.memory_space<vmem>>, vector<1x1x32x8xbf16>
    %89 = vector.shape_cast %88 : vector<1x1x32x8xbf16> to vector<32x8xbf16>
    %cst_70 = arith.constant dense<0.000000e+00> : vector<8x8xf32>
    %90 = tpu.matmul %15, %89, %cst_70 {dimension_numbers = #tpu.dot_dimension_numbers<[1], [0], [0], [1], [0, 0, 1, 1], [], []>} : vector<8x32xbf16>, vector<32x8xbf16>, vector<8x8xf32> -> vector<8x8xf32>
    %c2_71 = arith.constant 2 : index
    %c2_72 = arith.constant 2 : index
    %c0_73 = arith.constant 0 : index
    %c0_74 = arith.constant 0 : index
    %91 = vector.load %arg4[%c2_71, %c2_72, %c0_73, %c0_74] : memref<3x4x32x8xbf16, #tpu.memory_space<vmem>>, vector<1x1x32x8xbf16>
    %92 = vector.shape_cast %91 : vector<1x1x32x8xbf16> to vector<32x8xbf16>
    %cst_75 = arith.constant dense<0.000000e+00> : vector<8x8xf32>
    %93 = tpu.matmul %15, %92, %cst_75 {dimension_numbers = #tpu.dot_dimension_numbers<[1], [0], [0], [1], [0, 0, 1, 1], [], []>} : vector<8x32xbf16>, vector<32x8xbf16>, vector<8x8xf32> -> vector<8x8xf32>
    %cst_76 = arith.constant dense<0.000000e+00> : vector<8x8xf32>
    %94 = tpu.matmul %87, %90, %cst_76 {dimension_numbers = #tpu.dot_dimension_numbers<[1], [1], [0], [0], [0, 0, 1, 0], [], []>} : vector<8x8xf32>, vector<8x8xf32>, vector<8x8xf32> -> vector<8x8xf32>
    %c2_77 = arith.constant 2 : index
    %c0_78 = arith.constant 0 : index
    %c0_79 = arith.constant 0 : index
    %95 = vector.load %arg3[%c2_77, %c0_78, %c0_79] : memref<4x8x8xf32, #tpu.memory_space<vmem>>, vector<1x8x8xf32>
    %96 = vector.shape_cast %95 : vector<1x8x8xf32> to vector<8x8xf32>
    %97 = arith.addf %94, %96 : vector<8x8xf32>
    %98 = vector.broadcast %21 : vector<1x8xf32> to vector<8x8xf32>
    %99 = arith.addf %97, %98 : vector<8x8xf32>
    %cst_80 = arith.constant dense<0xFF800000> : vector<8xf32>
    %100 = vector.multi_reduction <maximumf>, %99, %cst_80 [1] : vector<8x8xf32> to vector<8xf32>
    %101 = vector.shape_cast %100 : vector<8xf32> to vector<8x1xf32>
    %102 = vector.broadcast %101 : vector<8x1xf32> to vector<8x8xf32>
    %103 = arith.subf %99, %102 : vector<8x8xf32>
    %104 = math.exp %103 : vector<8x8xf32>
    %cst_81 = arith.constant dense<0.000000e+00> : vector<8xf32>
    %105 = vector.multi_reduction <add>, %104, %cst_81 [1] : vector<8x8xf32> to vector<8xf32>
    %106 = vector.shape_cast %105 : vector<8xf32> to vector<8x1xf32>
    %107 = tpu.reciprocal %106 {approx = true} : vector<8x1xf32> -> vector<8x1xf32>
    %108 = vector.broadcast %107 : vector<8x1xf32> to vector<8x8xf32>
    %109 = arith.mulf %104, %108 : vector<8x8xf32>
    %cst_82 = arith.constant dense<0.000000e+00> : vector<8x8xf32>
    %110 = tpu.matmul %109, %93, %cst_82 {dimension_numbers = #tpu.dot_dimension_numbers<[1], [0], [0], [1], [0, 0, 1, 1], [], []>} : vector<8x8xf32>, vector<8x8xf32>, vector<8x8xf32> -> vector<8x8xf32>
    %111 = arith.truncf %110 : vector<8x8xf32> to vector<8x8xbf16>
    %c2_83 = arith.constant 2 : index
    %c0_84 = arith.constant 0 : index
    %c0_85 = arith.constant 0 : index
    %112 = vector.load %arg5[%c2_83, %c0_84, %c0_85] : memref<4x8x32xbf16, #tpu.memory_space<vmem>>, vector<1x8x32xbf16>
    %113 = vector.shape_cast %112 : vector<1x8x32xbf16> to vector<8x32xbf16>
    %cst_86 = arith.constant dense<0.000000e+00> : vector<8x32xf32>
    %114 = tpu.matmul %111, %113, %cst_86 {dimension_numbers = #tpu.dot_dimension_numbers<[1], [0], [0], [1], [0, 0, 1, 1], [], []>} : vector<8x8xbf16>, vector<8x32xbf16>, vector<8x32xf32> -> vector<8x32xf32>
    %115 = arith.addf %84, %114 : vector<8x32xf32>
    %c0_87 = arith.constant 0 : index
    %c3 = arith.constant 3 : index
    %c0_88 = arith.constant 0 : index
    %c0_89 = arith.constant 0 : index
    %116 = vector.load %arg4[%c0_87, %c3, %c0_88, %c0_89] : memref<3x4x32x8xbf16, #tpu.memory_space<vmem>>, vector<1x1x32x8xbf16>
    %117 = vector.shape_cast %116 : vector<1x1x32x8xbf16> to vector<32x8xbf16>
    %cst_90 = arith.constant dense<0.000000e+00> : vector<8x8xf32>
    %118 = tpu.matmul %15, %117, %cst_90 {dimension_numbers = #tpu.dot_dimension_numbers<[1], [0], [0], [1], [0, 0, 1, 1], [], []>} : vector<8x32xbf16>, vector<32x8xbf16>, vector<8x8xf32> -> vector<8x8xf32>
    %c1_91 = arith.constant 1 : index
    %c3_92 = arith.constant 3 : index
    %c0_93 = arith.constant 0 : index
    %c0_94 = arith.constant 0 : index
    %119 = vector.load %arg4[%c1_91, %c3_92, %c0_93, %c0_94] : memref<3x4x32x8xbf16, #tpu.memory_space<vmem>>, vector<1x1x32x8xbf16>
    %120 = vector.shape_cast %119 : vector<1x1x32x8xbf16> to vector<32x8xbf16>
    %cst_95 = arith.constant dense<0.000000e+00> : vector<8x8xf32>
    %121 = tpu.matmul %15, %120, %cst_95 {dimension_numbers = #tpu.dot_dimension_numbers<[1], [0], [0], [1], [0, 0, 1, 1], [], []>} : vector<8x32xbf16>, vector<32x8xbf16>, vector<8x8xf32> -> vector<8x8xf32>
    %c2_96 = arith.constant 2 : index
    %c3_97 = arith.constant 3 : index
    %c0_98 = arith.constant 0 : index
    %c0_99 = arith.constant 0 : index
    %122 = vector.load %arg4[%c2_96, %c3_97, %c0_98, %c0_99] : memref<3x4x32x8xbf16, #tpu.memory_space<vmem>>, vector<1x1x32x8xbf16>
    %123 = vector.shape_cast %122 : vector<1x1x32x8xbf16> to vector<32x8xbf16>
    %cst_100 = arith.constant dense<0.000000e+00> : vector<8x8xf32>
    %124 = tpu.matmul %15, %123, %cst_100 {dimension_numbers = #tpu.dot_dimension_numbers<[1], [0], [0], [1], [0, 0, 1, 1], [], []>} : vector<8x32xbf16>, vector<32x8xbf16>, vector<8x8xf32> -> vector<8x8xf32>
    %cst_101 = arith.constant dense<0.000000e+00> : vector<8x8xf32>
    %125 = tpu.matmul %118, %121, %cst_101 {dimension_numbers = #tpu.dot_dimension_numbers<[1], [1], [0], [0], [0, 0, 1, 0], [], []>} : vector<8x8xf32>, vector<8x8xf32>, vector<8x8xf32> -> vector<8x8xf32>
    %c3_102 = arith.constant 3 : index
    %c0_103 = arith.constant 0 : index
    %c0_104 = arith.constant 0 : index
    %126 = vector.load %arg3[%c3_102, %c0_103, %c0_104] : memref<4x8x8xf32, #tpu.memory_space<vmem>>, vector<1x8x8xf32>
    %127 = vector.shape_cast %126 : vector<1x8x8xf32> to vector<8x8xf32>
    %128 = arith.addf %125, %127 : vector<8x8xf32>
    %129 = vector.broadcast %21 : vector<1x8xf32> to vector<8x8xf32>
    %130 = arith.addf %128, %129 : vector<8x8xf32>
    %cst_105 = arith.constant dense<0xFF800000> : vector<8xf32>
    %131 = vector.multi_reduction <maximumf>, %130, %cst_105 [1] : vector<8x8xf32> to vector<8xf32>
    %132 = vector.shape_cast %131 : vector<8xf32> to vector<8x1xf32>
    %133 = vector.broadcast %132 : vector<8x1xf32> to vector<8x8xf32>
    %134 = arith.subf %130, %133 : vector<8x8xf32>
    %135 = math.exp %134 : vector<8x8xf32>
    %cst_106 = arith.constant dense<0.000000e+00> : vector<8xf32>
    %136 = vector.multi_reduction <add>, %135, %cst_106 [1] : vector<8x8xf32> to vector<8xf32>
    %137 = vector.shape_cast %136 : vector<8xf32> to vector<8x1xf32>
    %138 = tpu.reciprocal %137 {approx = true} : vector<8x1xf32> -> vector<8x1xf32>
    %139 = vector.broadcast %138 : vector<8x1xf32> to vector<8x8xf32>
    %140 = arith.mulf %135, %139 : vector<8x8xf32>
    %cst_107 = arith.constant dense<0.000000e+00> : vector<8x8xf32>
    %141 = tpu.matmul %140, %124, %cst_107 {dimension_numbers = #tpu.dot_dimension_numbers<[1], [0], [0], [1], [0, 0, 1, 1], [], []>} : vector<8x8xf32>, vector<8x8xf32>, vector<8x8xf32> -> vector<8x8xf32>
    %142 = arith.truncf %141 : vector<8x8xf32> to vector<8x8xbf16>
    %c3_108 = arith.constant 3 : index
    %c0_109 = arith.constant 0 : index
    %c0_110 = arith.constant 0 : index
    %143 = vector.load %arg5[%c3_108, %c0_109, %c0_110] : memref<4x8x32xbf16, #tpu.memory_space<vmem>>, vector<1x8x32xbf16>
    %144 = vector.shape_cast %143 : vector<1x8x32xbf16> to vector<8x32xbf16>
    %cst_111 = arith.constant dense<0.000000e+00> : vector<8x32xf32>
    %145 = tpu.matmul %142, %144, %cst_111 {dimension_numbers = #tpu.dot_dimension_numbers<[1], [0], [0], [1], [0, 0, 1, 1], [], []>} : vector<8x8xbf16>, vector<8x32xbf16>, vector<8x32xf32> -> vector<8x32xf32>
    %146 = arith.addf %115, %145 : vector<8x32xf32>
    %147 = arith.addf %1, %146 : vector<8x32xf32>
    %148 = arith.truncf %147 : vector<8x32xf32> to vector<8x32xbf16>
    %c0_112 = arith.constant 0 : index
    %c0_113 = arith.constant 0 : index
    %149 = vector.load %arg7[%c0_112, %c0_113] : memref<8x32xbf16, #tpu.memory_space<vmem>>, vector<8x32xbf16>
    tpu.vector_store %arg7[%c0_112, %c0_113], %148 {strides = array<i32>} : memref<8x32xbf16, #tpu.memory_space<vmem>>, vector<8x32xbf16>,
    return
  }
  func.func @transform_0(%arg0: i32) -> (i32, i32) {
    %c0_i32 = arith.constant 0 : i32
    %c0_i32_0 = arith.constant 0 : i32
    return %arg0, %c0_i32 : i32, i32
  }
  func.func @transform_1(%arg0: i32) -> (i32, i32, i32) {
    %c0_i32 = arith.constant 0 : i32
    %c0_i32_0 = arith.constant 0 : i32
    %c0_i32_1 = arith.constant 0 : i32
    return %arg0, %c0_i32, %c0_i32_0 : i32, i32, i32
  }
  func.func @transform_2(%arg0: i32) -> (i32, i32, i32) {
    %c0_i32 = arith.constant 0 : i32
    %c0_i32_0 = arith.constant 0 : i32
    %c0_i32_1 = arith.constant 0 : i32
    %c0_i32_2 = arith.constant 0 : i32
    return %c0_i32, %c0_i32_0, %c0_i32_1 : i32, i32, i32
  }
  func.func @transform_3(%arg0: i32) -> (i32, i32, i32, i32) {
    %c0_i32 = arith.constant 0 : i32
    %c0_i32_0 = arith.constant 0 : i32
    %c0_i32_1 = arith.constant 0 : i32
    %c0_i32_2 = arith.constant 0 : i32
    %c0_i32_3 = arith.constant 0 : i32
    return %c0_i32, %c0_i32_0, %c0_i32_1, %c0_i32_2 : i32, i32, i32, i32
  }
  func.func @transform_4(%arg0: i32) -> (i32, i32, i32) {
    %c0_i32 = arith.constant 0 : i32
    %c0_i32_0 = arith.constant 0 : i32
    %c0_i32_1 = arith.constant 0 : i32
    %c0_i32_2 = arith.constant 0 : i32
    return %c0_i32, %c0_i32_0, %c0_i32_1 : i32, i32, i32
  }
  func.func @transform_5(%arg0: i32) -> (i32, i32) {
    %c0_i32 = arith.constant 0 : i32
    %c0_i32_0 = arith.constant 0 : i32
    %c0_i32_1 = arith.constant 0 : i32
    return %c0_i32, %c0_i32_0 : i32, i32
  }
  func.func @transform_6(%arg0: i32) -> (i32, i32) {
    %c0_i32 = arith.constant 0 : i32
    %c0_i32_0 = arith.constant 0 : i32
    return %arg0, %c0_i32 : i32, i32
  }
}

module attributes {stable_mosaic.version = 11 : i64} {
  func.func @_ffn_block_kernel(%arg0: i32, %arg1: memref<8x32xbf16, #tpu.memory_space<vmem>>, %arg2: memref<1x32xf32, #tpu.memory_space<vmem>>, %arg3: memref<32x64xbf16, #tpu.memory_space<vmem>>, %arg4: memref<64x32xbf16, #tpu.memory_space<vmem>>, %arg5: memref<8x32xbf16, #tpu.memory_space<vmem>>) attributes {dimension_semantics = [#tpu.dimension_semantics<parallel>], iteration_bounds = array<i64: 2>, scalar_prefetch = 0 : i64, scratch_operands = 0 : i64, tpu.core_type = #tpu.core_type<tc>, window_params = [{transform_indices = @transform_0, window_bounds = array<i64: 8, 32>}, {pipeline_mode = #tpu.pipeline_mode<synchronous>, transform_indices = @transform_1, window_bounds = array<i64: 1, 32>}, {pipeline_mode = #tpu.pipeline_mode<synchronous>, transform_indices = @transform_2, window_bounds = array<i64: 32, 64>}, {pipeline_mode = #tpu.pipeline_mode<synchronous>, transform_indices = @transform_3, window_bounds = array<i64: 64, 32>}, {transform_indices = @transform_4, window_bounds = array<i64: 8, 32>}]} {
    %c0 = arith.constant 0 : index
    %c0_0 = arith.constant 0 : index
    %0 = vector.load %arg1[%c0, %c0_0] : memref<8x32xbf16, #tpu.memory_space<vmem>>, vector<8x32xbf16>
    %1 = arith.extf %0 : vector<8x32xbf16> to vector<8x32xf32>
    %2 = arith.mulf %1, %1 : vector<8x32xf32>
    %cst = arith.constant dense<0.000000e+00> : vector<8xf32>
    %3 = vector.multi_reduction <add>, %2, %cst [1] : vector<8x32xf32> to vector<8xf32>
    %4 = vector.shape_cast %3 : vector<8xf32> to vector<8x1xf32>
    %cst_1 = arith.constant 3.200000e+01 : f32
    %5 = vector.broadcast %cst_1 : f32 to vector<8x1xf32>
    %6 = arith.divf %4, %5 : vector<8x1xf32>
    %cst_2 = arith.constant 9.99999997E-7 : f32
    %7 = vector.broadcast %cst_2 : f32 to vector<8x1xf32>
    %8 = arith.addf %6, %7 : vector<8x1xf32>
    %9 = math.rsqrt %8 : vector<8x1xf32>
    %10 = vector.broadcast %9 : vector<8x1xf32> to vector<8x32xf32>
    %11 = arith.mulf %1, %10 : vector<8x32xf32>
    %c0_3 = arith.constant 0 : index
    %c0_4 = arith.constant 0 : index
    %12 = vector.load %arg2[%c0_3, %c0_4] : memref<1x32xf32, #tpu.memory_space<vmem>>, vector<1x32xf32>
    %13 = vector.broadcast %12 : vector<1x32xf32> to vector<8x32xf32>
    %14 = arith.mulf %11, %13 : vector<8x32xf32>
    %15 = arith.truncf %14 : vector<8x32xf32> to vector<8x32xbf16>
    %c0_5 = arith.constant 0 : index
    %c0_6 = arith.constant 0 : index
    %16 = vector.load %arg3[%c0_5, %c0_6] : memref<32x64xbf16, #tpu.memory_space<vmem>>, vector<32x64xbf16>
    %cst_7 = arith.constant dense<0.000000e+00> : vector<8x64xf32>
    %17 = tpu.matmul %15, %16, %cst_7 {dimension_numbers = #tpu.dot_dimension_numbers<[1], [0], [0], [1], [0, 0, 1, 1], [], []>} : vector<8x32xbf16>, vector<32x64xbf16>, vector<8x64xf32> -> vector<8x64xf32>
    %cst_8 = arith.constant 0.000000e+00 : f32
    %18 = vector.broadcast %cst_8 : f32 to vector<8x64xf32>
    %19 = arith.maximumf %17, %18 : vector<8x64xf32>
    %20 = arith.truncf %19 : vector<8x64xf32> to vector<8x64xbf16>
    %c0_9 = arith.constant 0 : index
    %c0_10 = arith.constant 0 : index
    %21 = vector.load %arg4[%c0_9, %c0_10] : memref<64x32xbf16, #tpu.memory_space<vmem>>, vector<64x32xbf16>
    %cst_11 = arith.constant dense<0.000000e+00> : vector<8x32xf32>
    %22 = tpu.matmul %20, %21, %cst_11 {dimension_numbers = #tpu.dot_dimension_numbers<[1], [0], [0], [1], [0, 0, 1, 1], [], []>} : vector<8x64xbf16>, vector<64x32xbf16>, vector<8x32xf32> -> vector<8x32xf32>
    %23 = arith.addf %1, %22 : vector<8x32xf32>
    %24 = arith.truncf %23 : vector<8x32xf32> to vector<8x32xbf16>
    %c0_12 = arith.constant 0 : index
    %c0_13 = arith.constant 0 : index
    %25 = vector.load %arg5[%c0_12, %c0_13] : memref<8x32xbf16, #tpu.memory_space<vmem>>, vector<8x32xbf16>
    tpu.vector_store %arg5[%c0_12, %c0_13], %24 {strides = array<i32>} : memref<8x32xbf16, #tpu.memory_space<vmem>>, vector<8x32xbf16>,
    return
  }
  func.func @transform_0(%arg0: i32) -> (i32, i32) {
    %c0_i32 = arith.constant 0 : i32
    %c0_i32_0 = arith.constant 0 : i32
    return %arg0, %c0_i32 : i32, i32
  }
  func.func @transform_1(%arg0: i32) -> (i32, i32) {
    %c0_i32 = arith.constant 0 : i32
    %c0_i32_0 = arith.constant 0 : i32
    %c0_i32_1 = arith.constant 0 : i32
    return %c0_i32, %c0_i32_0 : i32, i32
  }
  func.func @transform_2(%arg0: i32) -> (i32, i32) {
    %c0_i32 = arith.constant 0 : i32
    %c0_i32_0 = arith.constant 0 : i32
    %c0_i32_1 = arith.constant 0 : i32
    return %c0_i32, %c0_i32_0 : i32, i32
  }
  func.func @transform_3(%arg0: i32) -> (i32, i32) {
    %c0_i32 = arith.constant 0 : i32
    %c0_i32_0 = arith.constant 0 : i32
    %c0_i32_1 = arith.constant 0 : i32
    return %c0_i32, %c0_i32_0 : i32, i32
  }
  func.func @transform_4(%arg0: i32) -> (i32, i32) {
    %c0_i32 = arith.constant 0 : i32
    %c0_i32_0 = arith.constant 0 : i32
    return %arg0, %c0_i32 : i32, i32
  }
}

module attributes {stable_mosaic.version = 11 : i64} {
  func.func @_rmsnorm_kernel(%arg0: i32, %arg1: memref<8x32xbf16, #tpu.memory_space<vmem>>, %arg2: memref<1x32xf32, #tpu.memory_space<vmem>>, %arg3: memref<8x32xf32, #tpu.memory_space<vmem>>) attributes {dimension_semantics = [#tpu.dimension_semantics<parallel>], iteration_bounds = array<i64: 2>, scalar_prefetch = 0 : i64, scratch_operands = 0 : i64, tpu.core_type = #tpu.core_type<tc>, window_params = [{transform_indices = @transform_0, window_bounds = array<i64: 8, 32>}, {pipeline_mode = #tpu.pipeline_mode<synchronous>, transform_indices = @transform_1, window_bounds = array<i64: 1, 32>}, {transform_indices = @transform_2, window_bounds = array<i64: 8, 32>}]} {
    %c0 = arith.constant 0 : index
    %c0_0 = arith.constant 0 : index
    %0 = vector.load %arg1[%c0, %c0_0] : memref<8x32xbf16, #tpu.memory_space<vmem>>, vector<8x32xbf16>
    %1 = arith.extf %0 : vector<8x32xbf16> to vector<8x32xf32>
    %2 = arith.mulf %1, %1 : vector<8x32xf32>
    %cst = arith.constant dense<0.000000e+00> : vector<8xf32>
    %3 = vector.multi_reduction <add>, %2, %cst [1] : vector<8x32xf32> to vector<8xf32>
    %4 = vector.shape_cast %3 : vector<8xf32> to vector<8x1xf32>
    %cst_1 = arith.constant 3.200000e+01 : f32
    %5 = vector.broadcast %cst_1 : f32 to vector<8x1xf32>
    %6 = arith.divf %4, %5 : vector<8x1xf32>
    %cst_2 = arith.constant 9.99999997E-7 : f32
    %7 = vector.broadcast %cst_2 : f32 to vector<8x1xf32>
    %8 = arith.addf %6, %7 : vector<8x1xf32>
    %9 = math.rsqrt %8 : vector<8x1xf32>
    %10 = vector.broadcast %9 : vector<8x1xf32> to vector<8x32xf32>
    %11 = arith.mulf %1, %10 : vector<8x32xf32>
    %c0_3 = arith.constant 0 : index
    %c0_4 = arith.constant 0 : index
    %12 = vector.load %arg2[%c0_3, %c0_4] : memref<1x32xf32, #tpu.memory_space<vmem>>, vector<1x32xf32>
    %13 = vector.broadcast %12 : vector<1x32xf32> to vector<8x32xf32>
    %14 = arith.mulf %11, %13 : vector<8x32xf32>
    %c0_5 = arith.constant 0 : index
    %c0_6 = arith.constant 0 : index
    %15 = vector.load %arg3[%c0_5, %c0_6] : memref<8x32xf32, #tpu.memory_space<vmem>>, vector<8x32xf32>
    tpu.vector_store %arg3[%c0_5, %c0_6], %14 {strides = array<i32>} : memref<8x32xf32, #tpu.memory_space<vmem>>, vector<8x32xf32>,
    return
  }
  func.func @transform_0(%arg0: i32) -> (i32, i32) {
    %c0_i32 = arith.constant 0 : i32
    %c0_i32_0 = arith.constant 0 : i32
    return %arg0, %c0_i32 : i32, i32
  }
  func.func @transform_1(%arg0: i32) -> (i32, i32) {
    %c0_i32 = arith.constant 0 : i32
    %c0_i32_0 = arith.constant 0 : i32
    %c0_i32_1 = arith.constant 0 : i32
    return %c0_i32, %c0_i32_0 : i32, i32
  }
  func.func @transform_2(%arg0: i32) -> (i32, i32) {
    %c0_i32 = arith.constant 0 : i32
    %c0_i32_0 = arith.constant 0 : i32
    return %arg0, %c0_i32 : i32, i32
  }
}

</mosaic_0001>

<llo_original>
// kernel: t5_encoder_forward.9
$region0: #{t5_encoder_forward.9}
  #allocation0 [shape = 'u32[]', space=smem, size = 0x4, offset = 0x4, fixed_abs, tag = 'smem constant byte address 0x4 - core index']
  #allocation1 [shape = 'u32[144,128]{1,0:T(1,128)}', space=vmem, size = 0x12000, scoped, tag = 'internal scratch']
  %s0 = inlined_call_operand.vmem [shape: bf16[16,32], index: 0, kind: input, shape index: {}]
  %s1 = inlined_call_operand.vmem [shape: f32[1,32], index: 1, kind: input, shape index: {}]
  %s2 = inlined_call_operand.hbm [shape: f32[16,32], index: 2, kind: output, shape index: {}]
  %s3 = sld [smem:[#allocation0]]
  $region41: #{t5_encoder_forward.9} parent=0
    _
  %s5 = ssub.s32 1, %s3
  %s6 = scalar_select 0, %s5, %s3
  $region1: #{t5_encoder_forward.9} parent=0
    #allocation2 [shape = 'u8[8192]{0}', space=vmem, size = 0x2000, scoped, tag = 'output window, operand 0']
    #allocation3 [shape = 's32[2]{0}', space=sflag, size = 0x8, scoped, tag = 'scoped memory for t5_encoder_forward.9']
    %7 = vsyncpa [#allocation3], 0
    %s8 = scalar_lea.sflag [#allocation3], 1
    %9 = vsyncpa %s8, 0
    loop: start=0, step=1, limit=4
    $region2: #{t5_encoder_forward.9} parent=1 // loop_pre_header
      _
    $region3: #{t5_encoder_forward.9} parent=1 // loop_header
      %s11 = sphi 0, %s15
      %p12 = scmp.ge.s32.totalorder %s11, 4
      %s21 = sphi 0, %s23
      %s24 = sphi 0, %s21
      %s25 = sphi 0, %s24
      %s41 = sphi 0, %s25
      %s45 = sphi 0, %s45
      %s47 = sphi 0, %s45
      %s48 = sphi 0, %s47
      %s62 = sphi 0, %s48
      %s68 = sphi 0, %s70
      %s71 = sphi 0, %s68
      %s72 = sphi 0, %s71
      %s88 = sphi 0, %s72
    $region4: #{t5_encoder_forward.9} parent=1 // loop_header_branch
      %14 = sbr.rel (%p12) target = $region8
    $region5: #{t5_encoder_forward.9} parent=1 // loop_body
      %s16 = ssub.s32 %s11, 1
      %s17 = ssub.s32 %s11, 2
      %s18 = sadd.s32 %s11, 1
      %s19 = ssub.s32 %s11, %s18
      %p20 = scmp.eq.s32.totalorder %s19, 0
      %s22 = sadd.s32 %s21, 1
      %s23 = scalar_select %p20, %s21, %s22
      %p26 = pneg %p20
      %p27 = scmp.eq.s32.totalorder %s11, 1
      %p28 = por %p26, %p27
      %p29 = scmp.ne.s32.totalorder %s21, %s24
      %p30 = scmp.eq.s32.totalorder %s11, 0
      %p31 = por %p29, %p30
      %p32 = scmp.ne.s32.totalorder %s21, %s24
      %p33 = scmp.eq.s32.totalorder %s16, 1
      %p34 = por %p32, %p33
      %p35 = scmp.ne.s32.totalorder %s24, %s25
      %p36 = scmp.eq.s32.totalorder %s16, 0
      %p37 = por %p35, %p36
      %p38 = scmp.ne.s32.totalorder %s24, %s25
      %p39 = scmp.eq.s32.totalorder %s17, 1
      %p40 = por %p38, %p39
      %p42 = scmp.ne.s32.totalorder %s25, %s41
      %p43 = scmp.eq.s32.totalorder %s17, 0
      %p44 = por %p42, %p43
      %s46 = sadd.s32 %s45, 1
      %p49 = scmp.eq.s32.totalorder %s11, 1
      %p50 = scmp.ne.s32.totalorder %s45, %s47
      %p51 = scmp.eq.s32.totalorder %s11, 0
      %p52 = por %p50, %p51
      %p53 = scmp.ne.s32.totalorder %s45, %s47
      %p54 = scmp.eq.s32.totalorder %s16, 1
      %p55 = por %p53, %p54
      %p56 = scmp.ne.s32.totalorder %s47, %s48
      %p57 = scmp.eq.s32.totalorder %s16, 0
      %p58 = por %p56, %p57
      %p59 = scmp.ne.s32.totalorder %s47, %s48
      %p60 = scmp.eq.s32.totalorder %s17, 1
      %p61 = por %p59, %p60
      %p63 = scmp.ne.s32.totalorder %s48, %s62
      %p64 = scmp.eq.s32.totalorder %s17, 0
      %p65 = por %p63, %p64
      %s66 = ssub.s32 %s11, %s18
      %p67 = scmp.eq.s32.totalorder %s66, 0
      %s69 = sadd.s32 %s68, 1
      %s70 = scalar_select %p67, %s68, %s69
      %p73 = pneg %p67
      %p74 = scmp.eq.s32.totalorder %s11, 1
      %p75 = por %p73, %p74
      %p76 = scmp.ne.s32.totalorder %s68, %s71
      %p77 = scmp.eq.s32.totalorder %s11, 0
      %p78 = por %p76, %p77
      %p79 = scmp.ne.s32.totalorder %s68, %s71
      %p80 = scmp.eq.s32.totalorder %s16, 1
      %p81 = por %p79, %p80
      %p82 = scmp.ne.s32.totalorder %s71, %s72
      %p83 = scmp.eq.s32.totalorder %s16, 0
      %p84 = por %p82, %p83
      %p85 = scmp.ne.s32.totalorder %s71, %s72
      %p86 = scmp.eq.s32.totalorder %s17, 1
      %p87 = por %p85, %p86
      %p89 = scmp.ne.s32.totalorder %s72, %s88
      %p90 = scmp.eq.s32.totalorder %s17, 0
      %p91 = por %p89, %p90
      %p92 = scmp.le.s32.totalorder 1, %s11
      %p93 = scmp.lt.s32.totalorder %s11, 3
      %p94 = pnand %p92, %p93
      %p95 = pneg %p94
      // Predicated region
      $region9: #{t5_encoder_forward.9} parent=5 // pred_check
        _
      $region10: #{t5_encoder_forward.9} parent=5 // pred_check_branch
        %97 = sbr.rel (%p94) target = $region12
      $region11: #{t5_encoder_forward.9} parent=5 // pred_region
        %s98 = ssub.s32 %s11, 1
        // Predicated region
        $region13: #{t5_encoder_forward.9} parent=11 // pred_check
          %p99 = pneg %p58
        $region14: #{t5_encoder_forward.9} parent=11 // pred_check_branch
          %101 = sbr.rel (%p99) target = $region16
        $region15: #{t5_encoder_forward.9} parent=11 // pred_region
          _
        $region16: #{t5_encoder_forward.9} parent=11 // pred_fallthru
          _
      $region12: #{t5_encoder_forward.9} parent=5 // pred_fallthru
        _
      %p102 = scmp.lt.s32.totalorder %s11, 2
      // Predicated region
      $region17: #{t5_encoder_forward.9} parent=5 // pred_check
        %p103 = pneg %p102
      $region18: #{t5_encoder_forward.9} parent=5 // pred_check_branch
        %105 = sbr.rel (%p103) target = $region20
      $region19: #{t5_encoder_forward.9} parent=5 // pred_region
        // Predicated region
        $region21: #{t5_encoder_forward.9} parent=19 // pred_check
          %p106 = pneg %p31
        $region22: #{t5_encoder_forward.9} parent=19 // pred_check_branch
          %108 = sbr.rel (%p106) target = $region24
        $region23: #{t5_encoder_forward.9} parent=19 // pred_region
          %p109 = scmp.lt.s32.totalorder %s11, 1
          %s110 = scalar_select %p109, %s11, 1
          %s111 = smul.addr %s110, 4
          %s112 = scalar_lea.vmem %s0, %s111
        $region24: #{t5_encoder_forward.9} parent=19 // pred_fallthru
          _
      $region20: #{t5_encoder_forward.9} parent=5 // pred_fallthru
        _
      %p113 = scmp.le.s32.totalorder 1, %s11
      %p114 = scmp.lt.s32.totalorder %s11, 3
      %p115 = pnand %p113, %p114
      %p116 = pneg %p115
      // Predicated region
      $region25: #{t5_encoder_forward.9} parent=5 // pred_check
        _
      $region26: #{t5_encoder_forward.9} parent=5 // pred_check_branch
        %118 = sbr.rel (%p115) target = $region28
      $region27: #{t5_encoder_forward.9} parent=5 // pred_region
        %s119 = ssub.s32 %s11, 1
        %p120 = scmp.lt.s32.totalorder %s16, 1
        %s121 = scalar_select %p120, %s16, 1
        %s122 = smul.addr %s121, 4
        %s123 = scalar_lea.vmem %s0, %s122
        %p124 = pneg %p37
        %p125 = pneg %p34
        %p126 = pneg %p58
        %p127 = pneg %p55
        %p128 = pneg %p84
        %p129 = pneg %p81
        %s130 = sand.u32 %s71, 1
        %s131 = scalar_lea.sflag [#allocation3], %s130
        %s132 = sand.u32 %s71, 1
        %s133 = smul.addr %s132, 8
        %s134 = scalar_lea.vmem [#allocation2], %s133
        %p135 = scmp.lt.s32.totalorder %s16, 1
        %s136 = scalar_select %p135, %s16, 1
        %s137 = smul.addr %s136, 4
        %s138 = scalar_lea.vmem %s0, %s137
        %v139 = vld [vmem:[%s138] sm:$0xf]
        %v140 = vunpack.c.l.bf16 %v139
        %v141 = vmul.f32 %v140, %v140
        %vm142 = vcmask 261120
        %v143 = vsel %vm142, %v141, 0.0
        %144 = vadd.xlane.f32.xlu0 %v143
        %v145 = vpop.xlane.xlu0 %144
        %v146 = vrcp.pop 32.0
        %v147 = vmul.f32 %v145, %v146
        %v148 = vadd.f32 %v147, 1e-06
        %v149 = vrsqrt.pop %v148
        %v150 = vmul.f32 %v140, %v149
        %v151 = vld [vmem:[%s1] sm:$0x1]
        %v153 = vlaneseq
        %v154 = vshrl.u32 %v153, 7
        %v155 = vsub.s32 0, %v154
        %v156 = vrot.slane %v151, %v155
        %v158 = vmul.f32 %v150, %v156
        %159 = vst.msk [vmem:[%s134] sm:$0xff] %vm142, %v158
        %s160 = sand.u32 %s71, 1
        %s161 = scalar_lea.sflag [#allocation3], %s160
        %s162 = sand.u32 %s71, 1
        %s163 = smul.addr %s162, 8
        %s164 = scalar_lea.vmem [#allocation2], %s163
        // Predicated region
        $region29: #{t5_encoder_forward.9} parent=27 // pred_check
          %p165 = pneg %p81
        $region30: #{t5_encoder_forward.9} parent=27 // pred_check_branch
          %167 = sbr.rel (%p165) target = $region32
        $region31: #{t5_encoder_forward.9} parent=27 // pred_region
          %s169 = ssub.s32 128, 128
          %170 = vsyncadd %s161, %s169
          %s171 = smul.addr %s16, 128
          %s172 = scalar_lea.hbm %s2, %s171
          %s174 = sshll.u32 %s164, 4
          %s175 = int_to_ptr.vmem [resolvable:$true] %s174
          %177 = dma.vmem_to_hbm [thread:$0]  %s175, 128, %s172, %s161
        $region32: #{t5_encoder_forward.9} parent=27 // pred_fallthru
          _
      $region28: #{t5_encoder_forward.9} parent=5 // pred_fallthru
        _
      %p178 = scmp.le.s32.totalorder 2, %s11
      // Predicated region
      $region33: #{t5_encoder_forward.9} parent=5 // pred_check
        %p179 = pneg %p178
      $region34: #{t5_encoder_forward.9} parent=5 // pred_check_branch
        %181 = sbr.rel (%p179) target = $region36
      $region35: #{t5_encoder_forward.9} parent=5 // pred_region
        %s182 = ssub.s32 %s11, 2
        // Predicated region
        $region37: #{t5_encoder_forward.9} parent=35 // pred_check
          %p183 = pneg %p87
        $region38: #{t5_encoder_forward.9} parent=35 // pred_check_branch
          %185 = sbr.rel (%p183) target = $region40
        $region39: #{t5_encoder_forward.9} parent=35 // pred_region
          %s186 = sand.u32 %s72, 1
          %s187 = scalar_lea.sflag [#allocation3], %s186
          %s188 = sand.u32 %s72, 1
          %s189 = smul.addr %s188, 8
          %s190 = scalar_lea.vmem [#allocation2], %s189
          %191 = dma.done %s187, 128
        $region40: #{t5_encoder_forward.9} parent=35 // pred_fallthru
          _
      $region36: #{t5_encoder_forward.9} parent=5 // pred_fallthru
        _
    $region6: #{t5_encoder_forward.9} parent=1 // loop_footer
      %s15 = sadd.s32 1, %s11
    $region7: #{t5_encoder_forward.9} parent=1 // loop_footer_branch
      %10 = sbr.rel target = $region3
    $region8: #{t5_encoder_forward.9} parent=1 // loop_exit
      _
    %192 = vsyncpa [#allocation3], 1
    %s193 = scalar_lea.sflag [#allocation3], 1
    %194 = vsyncpa %s193, 1

// kernel: t5_encoder_forward.6
$region0: #{t5_encoder_forward.6}
  #allocation0 [shape = 'u32[]', space=smem, size = 0x4, offset = 0x4, fixed_abs, tag = 'smem constant byte address 0x4 - core index']
  #allocation1 [shape = 'u32[144,128]{1,0:T(1,128)}', space=vmem, size = 0x12000, scoped, tag = 'internal scratch']
  %s0 = inlined_call_operand.vmem [shape: bf16[16,32], index: 0, kind: input, shape index: {}]
  %s1 = inlined_call_operand.vmem [shape: f32[1,32], index: 1, kind: input, shape index: {}]
  %s2 = inlined_call_operand.vmem [shape: bf16[32,64], index: 2, kind: input, shape index: {}]
  %s3 = inlined_call_operand.vmem [shape: bf16[64,32], index: 3, kind: input, shape index: {}]
  %s4 = inlined_call_operand.vmem [shape: bf16[16,32], index: 4, kind: output, shape index: {}]
  %s5 = sld [smem:[#allocation0]]
  $region49: #{t5_encoder_forward.6} parent=0
    _
  %s7 = ssub.s32 1, %s5
  %s8 = scalar_select 0, %s7, %s5
  loop: start=0, step=1, limit=4
  $region2: #{t5_encoder_forward.6} parent=0 // loop_pre_header
    _
  $region3: #{t5_encoder_forward.6} parent=0 // loop_header
    %s10 = sphi 0, %s14
    %p11 = scmp.ge.s32.totalorder %s10, 4
    %s20 = sphi 0, %s22
    %s23 = sphi 0, %s20
    %s24 = sphi 0, %s23
    %s40 = sphi 0, %s24
    %s44 = sphi 0, %s44
    %s46 = sphi 0, %s44
    %s47 = sphi 0, %s46
    %s61 = sphi 0, %s47
    %s65 = sphi 0, %s65
    %s67 = sphi 0, %s65
    %s68 = sphi 0, %s67
    %s82 = sphi 0, %s68
    %s86 = sphi 0, %s86
    %s88 = sphi 0, %s86
    %s89 = sphi 0, %s88
    %s103 = sphi 0, %s89
    %s109 = sphi 0, %s111
    %s112 = sphi 0, %s109
    %s113 = sphi 0, %s112
    %s129 = sphi 0, %s113
  $region4: #{t5_encoder_forward.6} parent=0 // loop_header_branch
    %13 = sbr.rel (%p11) target = $region8
  $region5: #{t5_encoder_forward.6} parent=0 // loop_body
    %s15 = ssub.s32 %s10, 1
    %s16 = ssub.s32 %s10, 2
    %s17 = sadd.s32 %s10, 1
    %s18 = ssub.s32 %s10, %s17
    %p19 = scmp.eq.s32.totalorder %s18, 0
    %s21 = sadd.s32 %s20, 1
    %s22 = scalar_select %p19, %s20, %s21
    %p25 = pneg %p19
    %p26 = scmp.eq.s32.totalorder %s10, 1
    %p27 = por %p25, %p26
    %p28 = scmp.ne.s32.totalorder %s20, %s23
    %p29 = scmp.eq.s32.totalorder %s10, 0
    %p30 = por %p28, %p29
    %p31 = scmp.ne.s32.totalorder %s20, %s23
    %p32 = scmp.eq.s32.totalorder %s15, 1
    %p33 = por %p31, %p32
    %p34 = scmp.ne.s32.totalorder %s23, %s24
    %p35 = scmp.eq.s32.totalorder %s15, 0
    %p36 = por %p34, %p35
    %p37 = scmp.ne.s32.totalorder %s23, %s24
    %p38 = scmp.eq.s32.totalorder %s16, 1
    %p39 = por %p37, %p38
    %p41 = scmp.ne.s32.totalorder %s24, %s40
    %p42 = scmp.eq.s32.totalorder %s16, 0
    %p43 = por %p41, %p42
    %s45 = sadd.s32 %s44, 1
    %p48 = scmp.eq.s32.totalorder %s10, 1
    %p49 = scmp.ne.s32.totalorder %s44, %s46
    %p50 = scmp.eq.s32.totalorder %s10, 0
    %p51 = por %p49, %p50
    %p52 = scmp.ne.s32.totalorder %s44, %s46
    %p53 = scmp.eq.s32.totalorder %s15, 1
    %p54 = por %p52, %p53
    %p55 = scmp.ne.s32.totalorder %s46, %s47
    %p56 = scmp.eq.s32.totalorder %s15, 0
    %p57 = por %p55, %p56
    %p58 = scmp.ne.s32.totalorder %s46, %s47
    %p59 = scmp.eq.s32.totalorder %s16, 1
    %p60 = por %p58, %p59
    %p62 = scmp.ne.s32.totalorder %s47, %s61
    %p63 = scmp.eq.s32.totalorder %s16, 0
    %p64 = por %p62, %p63
    %s66 = sadd.s32 %s65, 1
    %p69 = scmp.eq.s32.totalorder %s10, 1
    %p70 = scmp.ne.s32.totalorder %s65, %s67
    %p71 = scmp.eq.s32.totalorder %s10, 0
    %p72 = por %p70, %p71
    %p73 = scmp.ne.s32.totalorder %s65, %s67
    %p74 = scmp.eq.s32.totalorder %s15, 1
    %p75 = por %p73, %p74
    %p76 = scmp.ne.s32.totalorder %s67, %s68
    %p77 = scmp.eq.s32.totalorder %s15, 0
    %p78 = por %p76, %p77
    %p79 = scmp.ne.s32.totalorder %s67, %s68
    %p80 = scmp.eq.s32.totalorder %s16, 1
    %p81 = por %p79, %p80
    %p83 = scmp.ne.s32.totalorder %s68, %s82
    %p84 = scmp.eq.s32.totalorder %s16, 0
    %p85 = por %p83, %p84
    %s87 = sadd.s32 %s86, 1
    %p90 = scmp.eq.s32.totalorder %s10, 1
    %p91 = scmp.ne.s32.totalorder %s86, %s88
    %p92 = scmp.eq.s32.totalorder %s10, 0
    %p93 = por %p91, %p92
    %p94 = scmp.ne.s32.totalorder %s86, %s88
    %p95 = scmp.eq.s32.totalorder %s15, 1
    %p96 = por %p94, %p95
    %p97 = scmp.ne.s32.totalorder %s88, %s89
    %p98 = scmp.eq.s32.totalorder %s15, 0
    %p99 = por %p97, %p98
    %p100 = scmp.ne.s32.totalorder %s88, %s89
    %p101 = scmp.eq.s32.totalorder %s16, 1
    %p102 = por %p100, %p101
    %p104 = scmp.ne.s32.totalorder %s89, %s103
    %p105 = scmp.eq.s32.totalorder %s16, 0
    %p106 = por %p104, %p105
    %s107 = ssub.s32 %s10, %s17
    %p108 = scmp.eq.s32.totalorder %s107, 0
    %s110 = sadd.s32 %s109, 1
    %s111 = scalar_select %p108, %s109, %s110
    %p114 = pneg %p108
    %p115 = scmp.eq.s32.totalorder %s10, 1
    %p116 = por %p114, %p115
    %p117 = scmp.ne.s32.totalorder %s109, %s112
    %p118 = scmp.eq.s32.totalorder %s10, 0
    %p119 = por %p117, %p118
    %p120 = scmp.ne.s32.totalorder %s109, %s112
    %p121 = scmp.eq.s32.totalorder %s15, 1
    %p122 = por %p120, %p121
    %p123 = scmp.ne.s32.totalorder %s112, %s113
    %p124 = scmp.eq.s32.totalorder %s15, 0
    %p125 = por %p123, %p124
    %p126 = scmp.ne.s32.totalorder %s112, %s113
    %p127 = scmp.eq.s32.totalorder %s16, 1
    %p128 = por %p126, %p127
    %p130 = scmp.ne.s32.totalorder %s113, %s129
    %p131 = scmp.eq.s32.totalorder %s16, 0
    %p132 = por %p130, %p131
    %p133 = scmp.le.s32.totalorder 1, %s10
    %p134 = scmp.lt.s32.totalorder %s10, 3
    %p135 = pnand %p133, %p134
    %p136 = pneg %p135
    // Predicated region
    $region9: #{t5_encoder_forward.6} parent=5 // pred_check
      _
    $region10: #{t5_encoder_forward.6} parent=5 // pred_check_branch
      %138 = sbr.rel (%p135) target = $region12
    $region11: #{t5_encoder_forward.6} parent=5 // pred_region
      %s139 = ssub.s32 %s10, 1
      // Predicated region
      $region13: #{t5_encoder_forward.6} parent=11 // pred_check
        %p140 = pneg %p57
      $region14: #{t5_encoder_forward.6} parent=11 // pred_check_branch
        %142 = sbr.rel (%p140) target = $region16
      $region15: #{t5_encoder_forward.6} parent=11 // pred_region
        _
      $region16: #{t5_encoder_forward.6} parent=11 // pred_fallthru
        _
      // Predicated region
      $region17: #{t5_encoder_forward.6} parent=11 // pred_check
        %p143 = pneg %p78
      $region18: #{t5_encoder_forward.6} parent=11 // pred_check_branch
        %145 = sbr.rel (%p143) target = $region20
      $region19: #{t5_encoder_forward.6} parent=11 // pred_region
        _
      $region20: #{t5_encoder_forward.6} parent=11 // pred_fallthru
        _
      // Predicated region
      $region21: #{t5_encoder_forward.6} parent=11 // pred_check
        %p146 = pneg %p99
      $region22: #{t5_encoder_forward.6} parent=11 // pred_check_branch
        %148 = sbr.rel (%p146) target = $region24
      $region23: #{t5_encoder_forward.6} parent=11 // pred_region
        _
      $region24: #{t5_encoder_forward.6} parent=11 // pred_fallthru
        _
    $region12: #{t5_encoder_forward.6} parent=5 // pred_fallthru
      _
    %p149 = scmp.lt.s32.totalorder %s10, 2
    // Predicated region
    $region25: #{t5_encoder_forward.6} parent=5 // pred_check
      %p150 = pneg %p149
    $region26: #{t5_encoder_forward.6} parent=5 // pred_check_branch
      %152 = sbr.rel (%p150) target = $region28
    $region27: #{t5_encoder_forward.6} parent=5 // pred_region
      // Predicated region
      $region29: #{t5_encoder_forward.6} parent=27 // pred_check
        %p153 = pneg %p30
      $region30: #{t5_encoder_forward.6} parent=27 // pred_check_branch
        %155 = sbr.rel (%p153) target = $region32
      $region31: #{t5_encoder_forward.6} parent=27 // pred_region
        %p156 = scmp.lt.s32.totalorder %s10, 1
        %s157 = scalar_select %p156, %s10, 1
        %s158 = smul.addr %s157, 4
        %s159 = scalar_lea.vmem %s0, %s158
      $region32: #{t5_encoder_forward.6} parent=27 // pred_fallthru
        _
    $region28: #{t5_encoder_forward.6} parent=5 // pred_fallthru
      _
    %p160 = scmp.le.s32.totalorder 1, %s10
    %p161 = scmp.lt.s32.totalorder %s10, 3
    %p162 = pnand %p160, %p161
    %p163 = pneg %p162
    // Predicated region
    $region33: #{t5_encoder_forward.6} parent=5 // pred_check
      _
    $region34: #{t5_encoder_forward.6} parent=5 // pred_check_branch
      %165 = sbr.rel (%p162) target = $region36
    $region35: #{t5_encoder_forward.6} parent=5 // pred_region
      %s166 = ssub.s32 %s10, 1
      %p167 = scmp.lt.s32.totalorder %s15, 1
      %s168 = scalar_select %p167, %s15, 1
      %s169 = smul.addr %s168, 4
      %s170 = scalar_lea.vmem %s0, %s169
      %p171 = pneg %p36
      %p172 = pneg %p33
      %p173 = pneg %p57
      %p174 = pneg %p54
      %p175 = pneg %p78
      %p176 = pneg %p75
      %p177 = pneg %p99
      %p178 = pneg %p96
      %p179 = pneg %p125
      %p180 = pneg %p122
      %p181 = scmp.lt.s32.totalorder %s15, 1
      %s182 = scalar_select %p181, %s15, 1
      %s183 = smul.addr %s182, 4
      %s184 = scalar_lea.vmem %s4, %s183
      %p185 = scmp.lt.s32.totalorder %s15, 1
      %s186 = scalar_select %p185, %s15, 1
      %s187 = smul.addr %s186, 4
      %s188 = scalar_lea.vmem %s0, %s187
      %p189 = scmp.lt.s32.totalorder %s15, 1
      %s190 = scalar_select %p189, %s15, 1
      %s191 = smul.addr %s190, 4
      %s192 = scalar_lea.vmem %s4, %s191
      %v194 = vld [vmem:[%s188] sm:$0xf]
      %v195 = vunpack.c.l.bf16 %v194
      %v196 = vmul.f32 %v195, %v195
      %vm197 = vcmask 261120
      %v198 = vsel %vm197, %v196, 0.0
      %199 = vadd.xlane.f32.xlu0 %v198
      %v200 = vpop.xlane.xlu0 %199
      %v201 = vrcp.pop 32.0
      %v202 = vmul.f32 %v200, %v201
      %v203 = vadd.f32 %v202, 1e-06
      %v204 = vrsqrt.pop %v203
      %v205 = vmul.f32 %v195, %v204
      %v206 = vld [vmem:[%s1] sm:$0x1]
      %v208 = vlaneseq
      %v209 = vshrl.u32 %v208, 7
      %v210 = vsub.s32 0, %v209
      %v211 = vrot.slane %v206, %v210
      %v213 = vmul.f32 %v205, %v211
      %v214 = vpack.c.bf16 %v213, %v213
      %v215 = vld [vmem:[%s2] sm:$0xf]
      %v216 = vld [vmem:[%s2 + $0x4] sm:$0xf]
      %v217 = vld [vmem:[%s2 + $0x8] sm:$0xf]
      %v218 = vld [vmem:[%s2 + $0xc] sm:$0xf]
      %v223 = vunpack.c.l.b16 %v215
      %v224 = vunpack.c.l.b16 %v216
      %v225 = vunpack.c.l.b16 %v217
      %v226 = vunpack.c.l.b16 %v218
      %v227 = vpack.c.b16 %v224, %v223
      %v228 = vpack.c.b16 %v226, %v225
      %v232 = vsel %vm197, %v214, 0
      %234 = vmatprep.subr.bf16.mxu0 0
      %235 = vmatpush1.bf16.msra.mxu0 %v227
      %236 = vmatprep.subr.bf16.mxu0 0
      %237 = vmatpush1.bf16.msra.mxu0 %v228
      %238 = vmatprep.subr.bf16.mxu0 0
      %239 = vmatpush1.bf16.msra.mxu0 0
      %240 = vmatprep.subr.bf16.mxu0 0
      %241 = vmatpush1.bf16.msra.mxu0 0
      %242 = vmatprep.subr.bf16.mxu0 0
      %243 = vmatpush1.bf16.msra.mxu0 0
      %244 = vmatprep.subr.bf16.mxu0 0
      %245 = vmatpush1.bf16.msra.mxu0 0
      %246 = vmatprep.subr.bf16.mxu0 0
      %247 = vmatpush1.bf16.msra.mxu0 0
      %248 = vmatprep.subr.bf16.mxu0 0
      %249 = vmatpush1.bf16.msra.mxu0 0
      %250 = vmatprep.subr.bf16.mxu0 0
      %251 = vmatpush1.bf16.msra.mxu0 0
      %252 = vmatprep.subr.bf16.mxu0 0
      %253 = vmatpush1.bf16.msra.mxu0 0
      %254 = vmatprep.subr.bf16.mxu0 0
      %255 = vmatpush1.bf16.msra.mxu0 0
      %256 = vmatprep.subr.bf16.mxu0 0
      %257 = vmatpush1.bf16.msra.mxu0 0
      %258 = vmatprep.subr.bf16.mxu0 0
      %259 = vmatpush1.bf16.msra.mxu0 0
      %260 = vmatprep.subr.bf16.mxu0 0
      %261 = vmatpush1.bf16.msra.mxu0 0
      %262 = vmatprep.subr.bf16.mxu0 0
      %263 = vmatpush1.bf16.msra.mxu0 0
      %264 = vmatprep.subr.bf16.mxu0 0
      %265 = vmatpush1.bf16.msra.mxu0 0
      %266 = vmatprep.mubr.bf16.mxu0 0
      %267 = vmatmul.mubr.bf16.gmra.mrb[0].mxu0 %v232
      %v268 = vpop.f32.mrb[0].mxu0
      %v269 = vadd.f32 0.0, %v268
      %v270 = vpop.f32.mrb[0].mxu0
      %v271 = vpop.f32.mrb[0].mxu0
      %v272 = vpop.f32.mrb[0].mxu0
      %273 = vdwg.mxu0
      %v274 = vmax.f32 %v269, 0.0
      %v275 = vpack.c.bf16 %v274, %v274
      %v276 = vld [vmem:[%s3] sm:$0xf]
      %v277 = vld [vmem:[%s3 + $0x4] sm:$0xf]
      %v278 = vld [vmem:[%s3 + $0x8] sm:$0xf]
      %v279 = vld [vmem:[%s3 + $0xc] sm:$0xf]
      %v280 = vld [vmem:[%s3 + $0x10] sm:$0xf]
      %v281 = vld [vmem:[%s3 + $0x14] sm:$0xf]
      %v282 = vld [vmem:[%s3 + $0x18] sm:$0xf]
      %v283 = vld [vmem:[%s3 + $0x1c] sm:$0xf]
      %v292 = vunpack.c.l.b16 %v276
      %v293 = vunpack.c.l.b16 %v277
      %v294 = vunpack.c.l.b16 %v278
      %v295 = vunpack.c.l.b16 %v279
      %v296 = vunpack.c.l.b16 %v280
      %v297 = vunpack.c.l.b16 %v281
      %v298 = vunpack.c.l.b16 %v282
      %v299 = vunpack.c.l.b16 %v283
      %v300 = vpack.c.b16 %v293, %v292
      %v301 = vpack.c.b16 %v295, %v294
      %v302 = vpack.c.b16 %v297, %v296
      %v303 = vpack.c.b16 %v299, %v298
      %vm308 = vcmask 523264
      %v310 = vsel %vm308, %v275, 0
      %312 = vmatprep.subr.bf16.mxu0 0
      %313 = vmatpush1.bf16.msra.mxu0 %v300
      %314 = vmatprep.subr.bf16.mxu0 0
      %315 = vmatpush1.bf16.msra.mxu0 %v301
      %316 = vmatprep.subr.bf16.mxu0 0
      %317 = vmatpush1.bf16.msra.mxu0 %v302
      %318 = vmatprep.subr.bf16.mxu0 0
      %319 = vmatpush1.bf16.msra.mxu0 %v303
      %320 = vmatprep.subr.bf16.mxu0 0
      %321 = vmatpush1.bf16.msra.mxu0 0
      %322 = vmatprep.subr.bf16.mxu0 0
      %323 = vmatpush1.bf16.msra.mxu0 0
      %324 = vmatprep.subr.bf16.mxu0 0
      %325 = vmatpush1.bf16.msra.mxu0 0
      %326 = vmatprep.subr.bf16.mxu0 0
      %327 = vmatpush1.bf16.msra.mxu0 0
      %328 = vmatprep.subr.bf16.mxu0 0
      %329 = vmatpush1.bf16.msra.mxu0 0
      %330 = vmatprep.subr.bf16.mxu0 0
      %331 = vmatpush1.bf16.msra.mxu0 0
      %332 = vmatprep.subr.bf16.mxu0 0
      %333 = vmatpush1.bf16.msra.mxu0 0
      %334 = vmatprep.subr.bf16.mxu0 0
      %335 = vmatpush1.bf16.msra.mxu0 0
      %336 = vmatprep.subr.bf16.mxu0 0
      %337 = vmatpush1.bf16.msra.mxu0 0
      %338 = vmatprep.subr.bf16.mxu0 0
      %339 = vmatpush1.bf16.msra.mxu0 0
      %340 = vmatprep.subr.bf16.mxu0 0
      %341 = vmatpush1.bf16.msra.mxu0 0
      %342 = vmatprep.subr.bf16.mxu0 0
      %343 = vmatpush1.bf16.msra.mxu0 0
      %344 = vmatprep.mubr.bf16.mxu0 0
      %345 = vmatmul.mubr.bf16.gmra.mrb[0].mxu0 %v310
      %v346 = vpop.f32.mrb[0].mxu0
      %v347 = vadd.f32 0.0, %v346
      %v348 = vpop.f32.mrb[0].mxu0
      %v349 = vpop.f32.mrb[0].mxu0
      %v350 = vpop.f32.mrb[0].mxu0
      %351 = vdwg.mxu0
      %v352 = vadd.f32 %v195, %v347
      %v353 = vpack.c.bf16 %v352, %v352
      %vm354 = vcmask 257024
      %355 = vst.msk [vmem:[%s192] sm:$0xf] %vm354, %v353
      %p356 = scmp.lt.s32.totalorder %s15, 1
      %s357 = scalar_select %p356, %s15, 1
      %s358 = smul.addr %s357, 4
      %s359 = scalar_lea.vmem %s4, %s358
      // Predicated region
      $region37: #{t5_encoder_forward.6} parent=35 // pred_check
        %p360 = pneg %p122
      $region38: #{t5_encoder_forward.6} parent=35 // pred_check_branch
        %362 = sbr.rel (%p360) target = $region40
      $region39: #{t5_encoder_forward.6} parent=35 // pred_region
        _
      $region40: #{t5_encoder_forward.6} parent=35 // pred_fallthru
        _
    $region36: #{t5_encoder_forward.6} parent=5 // pred_fallthru
      _
    %p363 = scmp.le.s32.totalorder 2, %s10
    // Predicated region
    $region41: #{t5_encoder_forward.6} parent=5 // pred_check
      %p364 = pneg %p363
    $region42: #{t5_encoder_forward.6} parent=5 // pred_check_branch
      %366 = sbr.rel (%p364) target = $region44
    $region43: #{t5_encoder_forward.6} parent=5 // pred_region
      %s367 = ssub.s32 %s10, 2
      // Predicated region
      $region45: #{t5_encoder_forward.6} parent=43 // pred_check
        %p368 = pneg %p128
      $region46: #{t5_encoder_forward.6} parent=43 // pred_check_branch
        %370 = sbr.rel (%p368) target = $region48
      $region47: #{t5_encoder_forward.6} parent=43 // pred_region
        %p371 = scmp.lt.s32.totalorder %s16, 1
        %s372 = scalar_select %p371, %s16, 1
        %s373 = smul.addr %s372, 4
        %s374 = scalar_lea.vmem %s4, %s373
      $region48: #{t5_encoder_forward.6} parent=43 // pred_fallthru
        _
    $region44: #{t5_encoder_forward.6} parent=5 // pred_fallthru
      _
  $region6: #{t5_encoder_forward.6} parent=0 // loop_footer
    %s14 = sadd.s32 1, %s10
  $region7: #{t5_encoder_forward.6} parent=0 // loop_footer_branch
    %9 = sbr.rel target = $region3
  $region8: #{t5_encoder_forward.6} parent=0 // loop_exit
    _

// kernel: t5_encoder_forward.5
$region0: #{t5_encoder_forward.5}
  #allocation0 [shape = 'u32[]', space=smem, size = 0x4, offset = 0x4, fixed_abs, tag = 'smem constant byte address 0x4 - core index']
  #allocation1 [shape = 'u32[144,128]{1,0:T(1,128)}', space=vmem, size = 0x12000, scoped, tag = 'internal scratch']
  %s0 = inlined_call_operand.vmem [shape: bf16[16,32], index: 0, kind: input, shape index: {}]
  %s1 = inlined_call_operand.vmem [shape: f32[2,1,8], index: 1, kind: input, shape index: {}]
  %s2 = inlined_call_operand.vmem [shape: f32[4,8,8], index: 2, kind: input, shape index: {}]
  %s3 = inlined_call_operand.vmem [shape: bf16[3,4,32,8], index: 3, kind: input, shape index: {}]
  %s4 = inlined_call_operand.vmem [shape: bf16[4,8,32], index: 4, kind: input, shape index: {}]
  %s5 = inlined_call_operand.vmem [shape: f32[1,32], index: 5, kind: input, shape index: {}]
  %s6 = inlined_call_operand.vmem [shape: bf16[16,32], index: 6, kind: output, shape index: {}]
  %s7 = sld [smem:[#allocation0]]
  $region57: #{t5_encoder_forward.5} parent=0
    _
  %s9 = ssub.s32 1, %s7
  %s10 = scalar_select 0, %s9, %s7
  loop: start=0, step=1, limit=4
  $region2: #{t5_encoder_forward.5} parent=0 // loop_pre_header
    _
  $region3: #{t5_encoder_forward.5} parent=0 // loop_header
    %s12 = sphi 0, %s16
    %p13 = scmp.ge.s32.totalorder %s12, 4
    %s22 = sphi 0, %s24
    %s25 = sphi 0, %s22
    %s26 = sphi 0, %s25
    %s42 = sphi 0, %s26
    %s48 = sphi 0, %s50
    %s51 = sphi 0, %s48
    %s52 = sphi 0, %s51
    %s68 = sphi 0, %s52
    %s72 = sphi 0, %s72
    %s74 = sphi 0, %s72
    %s75 = sphi 0, %s74
    %s89 = sphi 0, %s75
    %s93 = sphi 0, %s93
    %s95 = sphi 0, %s93
    %s96 = sphi 0, %s95
    %s110 = sphi 0, %s96
    %s114 = sphi 0, %s114
    %s116 = sphi 0, %s114
    %s117 = sphi 0, %s116
    %s131 = sphi 0, %s117
    %s135 = sphi 0, %s135
    %s137 = sphi 0, %s135
    %s138 = sphi 0, %s137
    %s152 = sphi 0, %s138
    %s158 = sphi 0, %s160
    %s161 = sphi 0, %s158
    %s162 = sphi 0, %s161
    %s178 = sphi 0, %s162
  $region4: #{t5_encoder_forward.5} parent=0 // loop_header_branch
    %15 = sbr.rel (%p13) target = $region8
  $region5: #{t5_encoder_forward.5} parent=0 // loop_body
    %s17 = ssub.s32 %s12, 1
    %s18 = ssub.s32 %s12, 2
    %s19 = sadd.s32 %s12, 1
    %s20 = ssub.s32 %s12, %s19
    %p21 = scmp.eq.s32.totalorder %s20, 0
    %s23 = sadd.s32 %s22, 1
    %s24 = scalar_select %p21, %s22, %s23
    %p27 = pneg %p21
    %p28 = scmp.eq.s32.totalorder %s12, 1
    %p29 = por %p27, %p28
    %p30 = scmp.ne.s32.totalorder %s22, %s25
    %p31 = scmp.eq.s32.totalorder %s12, 0
    %p32 = por %p30, %p31
    %p33 = scmp.ne.s32.totalorder %s22, %s25
    %p34 = scmp.eq.s32.totalorder %s17, 1
    %p35 = por %p33, %p34
    %p36 = scmp.ne.s32.totalorder %s25, %s26
    %p37 = scmp.eq.s32.totalorder %s17, 0
    %p38 = por %p36, %p37
    %p39 = scmp.ne.s32.totalorder %s25, %s26
    %p40 = scmp.eq.s32.totalorder %s18, 1
    %p41 = por %p39, %p40
    %p43 = scmp.ne.s32.totalorder %s26, %s42
    %p44 = scmp.eq.s32.totalorder %s18, 0
    %p45 = por %p43, %p44
    %s46 = ssub.s32 %s12, %s19
    %p47 = scmp.eq.s32.totalorder %s46, 0
    %s49 = sadd.s32 %s48, 1
    %s50 = scalar_select %p47, %s48, %s49
    %p53 = pneg %p47
    %p54 = scmp.eq.s32.totalorder %s12, 1
    %p55 = por %p53, %p54
    %p56 = scmp.ne.s32.totalorder %s48, %s51
    %p57 = scmp.eq.s32.totalorder %s12, 0
    %p58 = por %p56, %p57
    %p59 = scmp.ne.s32.totalorder %s48, %s51
    %p60 = scmp.eq.s32.totalorder %s17, 1
    %p61 = por %p59, %p60
    %p62 = scmp.ne.s32.totalorder %s51, %s52
    %p63 = scmp.eq.s32.totalorder %s17, 0
    %p64 = por %p62, %p63
    %p65 = scmp.ne.s32.totalorder %s51, %s52
    %p66 = scmp.eq.s32.totalorder %s18, 1
    %p67 = por %p65, %p66
    %p69 = scmp.ne.s32.totalorder %s52, %s68
    %p70 = scmp.eq.s32.totalorder %s18, 0
    %p71 = por %p69, %p70
    %s73 = sadd.s32 %s72, 1
    %p76 = scmp.eq.s32.totalorder %s12, 1
    %p77 = scmp.ne.s32.totalorder %s72, %s74
    %p78 = scmp.eq.s32.totalorder %s12, 0
    %p79 = por %p77, %p78
    %p80 = scmp.ne.s32.totalorder %s72, %s74
    %p81 = scmp.eq.s32.totalorder %s17, 1
    %p82 = por %p80, %p81
    %p83 = scmp.ne.s32.totalorder %s74, %s75
    %p84 = scmp.eq.s32.totalorder %s17, 0
    %p85 = por %p83, %p84
    %p86 = scmp.ne.s32.totalorder %s74, %s75
    %p87 = scmp.eq.s32.totalorder %s18, 1
    %p88 = por %p86, %p87
    %p90 = scmp.ne.s32.totalorder %s75, %s89
    %p91 = scmp.eq.s32.totalorder %s18, 0
    %p92 = por %p90, %p91
    %s94 = sadd.s32 %s93, 1
    %p97 = scmp.eq.s32.totalorder %s12, 1
    %p98 = scmp.ne.s32.totalorder %s93, %s95
    %p99 = scmp.eq.s32.totalorder %s12, 0
    %p100 = por %p98, %p99
    %p101 = scmp.ne.s32.totalorder %s93, %s95
    %p102 = scmp.eq.s32.totalorder %s17, 1
    %p103 = por %p101, %p102
    %p104 = scmp.ne.s32.totalorder %s95, %s96
    %p105 = scmp.eq.s32.totalorder %s17, 0
    %p106 = por %p104, %p105
    %p107 = scmp.ne.s32.totalorder %s95, %s96
    %p108 = scmp.eq.s32.totalorder %s18, 1
    %p109 = por %p107, %p108
    %p111 = scmp.ne.s32.totalorder %s96, %s110
    %p112 = scmp.eq.s32.totalorder %s18, 0
    %p113 = por %p111, %p112
    %s115 = sadd.s32 %s114, 1
    %p118 = scmp.eq.s32.totalorder %s12, 1
    %p119 = scmp.ne.s32.totalorder %s114, %s116
    %p120 = scmp.eq.s32.totalorder %s12, 0
    %p121 = por %p119, %p120
    %p122 = scmp.ne.s32.totalorder %s114, %s116
    %p123 = scmp.eq.s32.totalorder %s17, 1
    %p124 = por %p122, %p123
    %p125 = scmp.ne.s32.totalorder %s116, %s117
    %p126 = scmp.eq.s32.totalorder %s17, 0
    %p127 = por %p125, %p126
    %p128 = scmp.ne.s32.totalorder %s116, %s117
    %p129 = scmp.eq.s32.totalorder %s18, 1
    %p130 = por %p128, %p129
    %p132 = scmp.ne.s32.totalorder %s117, %s131
    %p133 = scmp.eq.s32.totalorder %s18, 0
    %p134 = por %p132, %p133
    %s136 = sadd.s32 %s135, 1
    %p139 = scmp.eq.s32.totalorder %s12, 1
    %p140 = scmp.ne.s32.totalorder %s135, %s137
    %p141 = scmp.eq.s32.totalorder %s12, 0
    %p142 = por %p140, %p141
    %p143 = scmp.ne.s32.totalorder %s135, %s137
    %p144 = scmp.eq.s32.totalorder %s17, 1
    %p145 = por %p143, %p144
    %p146 = scmp.ne.s32.totalorder %s137, %s138
    %p147 = scmp.eq.s32.totalorder %s17, 0
    %p148 = por %p146, %p147
    %p149 = scmp.ne.s32.totalorder %s137, %s138
    %p150 = scmp.eq.s32.totalorder %s18, 1
    %p151 = por %p149, %p150
    %p153 = scmp.ne.s32.totalorder %s138, %s152
    %p154 = scmp.eq.s32.totalorder %s18, 0
    %p155 = por %p153, %p154
    %s156 = ssub.s32 %s12, %s19
    %p157 = scmp.eq.s32.totalorder %s156, 0
    %s159 = sadd.s32 %s158, 1
    %s160 = scalar_select %p157, %s158, %s159
    %p163 = pneg %p157
    %p164 = scmp.eq.s32.totalorder %s12, 1
    %p165 = por %p163, %p164
    %p166 = scmp.ne.s32.totalorder %s158, %s161
    %p167 = scmp.eq.s32.totalorder %s12, 0
    %p168 = por %p166, %p167
    %p169 = scmp.ne.s32.totalorder %s158, %s161
    %p170 = scmp.eq.s32.totalorder %s17, 1
    %p171 = por %p169, %p170
    %p172 = scmp.ne.s32.totalorder %s161, %s162
    %p173 = scmp.eq.s32.totalorder %s17, 0
    %p174 = por %p172, %p173
    %p175 = scmp.ne.s32.totalorder %s161, %s162
    %p176 = scmp.eq.s32.totalorder %s18, 1
    %p177 = por %p175, %p176
    %p179 = scmp.ne.s32.totalorder %s162, %s178
    %p180 = scmp.eq.s32.totalorder %s18, 0
    %p181 = por %p179, %p180
    %p182 = scmp.le.s32.totalorder 1, %s12
    %p183 = scmp.lt.s32.totalorder %s12, 3
    %p184 = pnand %p182, %p183
    %p185 = pneg %p184
    // Predicated region
    $region9: #{t5_encoder_forward.5} parent=5 // pred_check
      _
    $region10: #{t5_encoder_forward.5} parent=5 // pred_check_branch
      %187 = sbr.rel (%p184) target = $region12
    $region11: #{t5_encoder_forward.5} parent=5 // pred_region
      %s188 = ssub.s32 %s12, 1
      // Predicated region
      $region13: #{t5_encoder_forward.5} parent=11 // pred_check
        %p189 = pneg %p85
      $region14: #{t5_encoder_forward.5} parent=11 // pred_check_branch
        %191 = sbr.rel (%p189) target = $region16
      $region15: #{t5_encoder_forward.5} parent=11 // pred_region
        _
      $region16: #{t5_encoder_forward.5} parent=11 // pred_fallthru
        _
      // Predicated region
      $region17: #{t5_encoder_forward.5} parent=11 // pred_check
        %p192 = pneg %p106
      $region18: #{t5_encoder_forward.5} parent=11 // pred_check_branch
        %194 = sbr.rel (%p192) target = $region20
      $region19: #{t5_encoder_forward.5} parent=11 // pred_region
        _
      $region20: #{t5_encoder_forward.5} parent=11 // pred_fallthru
        _
      // Predicated region
      $region21: #{t5_encoder_forward.5} parent=11 // pred_check
        %p195 = pneg %p127
      $region22: #{t5_encoder_forward.5} parent=11 // pred_check_branch
        %197 = sbr.rel (%p195) target = $region24
      $region23: #{t5_encoder_forward.5} parent=11 // pred_region
        _
      $region24: #{t5_encoder_forward.5} parent=11 // pred_fallthru
        _
      // Predicated region
      $region25: #{t5_encoder_forward.5} parent=11 // pred_check
        %p198 = pneg %p148
      $region26: #{t5_encoder_forward.5} parent=11 // pred_check_branch
        %200 = sbr.rel (%p198) target = $region28
      $region27: #{t5_encoder_forward.5} parent=11 // pred_region
        _
      $region28: #{t5_encoder_forward.5} parent=11 // pred_fallthru
        _
    $region12: #{t5_encoder_forward.5} parent=5 // pred_fallthru
      _
    %p201 = scmp.lt.s32.totalorder %s12, 2
    // Predicated region
    $region29: #{t5_encoder_forward.5} parent=5 // pred_check
      %p202 = pneg %p201
    $region30: #{t5_encoder_forward.5} parent=5 // pred_check_branch
      %204 = sbr.rel (%p202) target = $region32
    $region31: #{t5_encoder_forward.5} parent=5 // pred_region
      // Predicated region
      $region33: #{t5_encoder_forward.5} parent=31 // pred_check
        %p205 = pneg %p32
      $region34: #{t5_encoder_forward.5} parent=31 // pred_check_branch
        %207 = sbr.rel (%p205) target = $region36
      $region35: #{t5_encoder_forward.5} parent=31 // pred_region
        %p208 = scmp.lt.s32.totalorder %s12, 1
        %s209 = scalar_select %p208, %s12, 1
        %s210 = smul.addr %s209, 4
        %s211 = scalar_lea.vmem %s0, %s210
      $region36: #{t5_encoder_forward.5} parent=31 // pred_fallthru
        _
      // Predicated region
      $region37: #{t5_encoder_forward.5} parent=31 // pred_check
        %p212 = pneg %p58
      $region38: #{t5_encoder_forward.5} parent=31 // pred_check_branch
        %214 = sbr.rel (%p212) target = $region40
      $region39: #{t5_encoder_forward.5} parent=31 // pred_region
        %p215 = scmp.lt.s32.totalorder %s12, 1
        %s216 = scalar_select %p215, %s12, 1
        %s217 = scalar_lea.vmem %s1, %s216
      $region40: #{t5_encoder_forward.5} parent=31 // pred_fallthru
        _
    $region32: #{t5_encoder_forward.5} parent=5 // pred_fallthru
      _
    %p218 = scmp.le.s32.totalorder 1, %s12
    %p219 = scmp.lt.s32.totalorder %s12, 3
    %p220 = pnand %p218, %p219
    %p221 = pneg %p220
    // Predicated region
    $region41: #{t5_encoder_forward.5} parent=5 // pred_check
      _
    $region42: #{t5_encoder_forward.5} parent=5 // pred_check_branch
      %223 = sbr.rel (%p220) target = $region44
    $region43: #{t5_encoder_forward.5} parent=5 // pred_region
      %s224 = ssub.s32 %s12, 1
      %p225 = scmp.lt.s32.totalorder %s17, 1
      %s226 = scalar_select %p225, %s17, 1
      %s227 = smul.addr %s226, 4
      %s228 = scalar_lea.vmem %s0, %s227
      %p229 = pneg %p38
      %p230 = pneg %p35
      %p231 = scmp.lt.s32.totalorder %s17, 1
      %s232 = scalar_select %p231, %s17, 1
      %s233 = scalar_lea.vmem %s1, %s232
      %p234 = pneg %p64
      %p235 = pneg %p61
      %p236 = pneg %p85
      %p237 = pneg %p82
      %p238 = pneg %p106
      %p239 = pneg %p103
      %p240 = pneg %p127
      %p241 = pneg %p124
      %p242 = pneg %p148
      %p243 = pneg %p145
      %p244 = pneg %p174
      %p245 = pneg %p171
      %p246 = scmp.lt.s32.totalorder %s17, 1
      %s247 = scalar_select %p246, %s17, 1
      %s248 = smul.addr %s247, 4
      %s249 = scalar_lea.vmem %s6, %s248
      %p250 = scmp.lt.s32.totalorder %s17, 1
      %s251 = scalar_select %p250, %s17, 1
      %s252 = smul.addr %s251, 4
      %s253 = scalar_lea.vmem %s0, %s252
      %p254 = scmp.lt.s32.totalorder %s17, 1
      %s255 = scalar_select %p254, %s17, 1
      %s256 = scalar_lea.vmem %s1, %s255
      %p257 = scmp.lt.s32.totalorder %s17, 1
      %s258 = scalar_select %p257, %s17, 1
      %s259 = smul.addr %s258, 4
      %s260 = scalar_lea.vmem %s6, %s259
      %v262 = vld [vmem:[%s253] sm:$0xf]
      %v263 = vunpack.c.l.bf16 %v262
      %v264 = vmul.f32 %v263, %v263
      %vm265 = vcmask 261120
      %v266 = vsel %vm265, %v264, 0.0
      %267 = vadd.xlane.f32.xlu0 %v266
      %v268 = vpop.xlane.xlu0 %267
      %v269 = vrcp.pop 32.0
      %v270 = vmul.f32 %v268, %v269
      %v271 = vadd.f32 %v270, 1e-06
      %v272 = vrsqrt.pop %v271
      %v273 = vmul.f32 %v263, %v272
      %v274 = vld [vmem:[%s5] sm:$0x1]
      %v276 = vlaneseq
      %v277 = vshrl.u32 %v276, 7
      %v278 = vsub.s32 0, %v277
      %v279 = vrot.slane %v274, %v278
      %v281 = vmul.f32 %v273, %v279
      %v282 = vpack.c.bf16 %v281, %v281
      %v283 = vld [vmem:[%s256] sm:$0x1]
      %v284 = vsub.f32 1.0, %v283
      %v285 = vmul.f32 %v284, -1e+09
      %v286 = vld [vmem:[%s3] sm:$0xf]
      %v287 = vld [vmem:[%s3 + $0x4] sm:$0xf]
      %v288 = vld [vmem:[%s3 + $0x8] sm:$0xf]
      %v289 = vld [vmem:[%s3 + $0xc] sm:$0xf]
      %v294 = vunpack.c.l.b16 %v286
      %v295 = vunpack.c.l.b16 %v287
      %v296 = vunpack.c.l.b16 %v288
      %v297 = vunpack.c.l.b16 %v289
      %v298 = vpack.c.b16 %v295, %v294
      %v299 = vpack.c.b16 %v297, %v296
      %v303 = vsel %vm265, %v282, 0
      %305 = vmatprep.subr.bf16.mxu0 0
      %306 = vmatpush1.bf16.msra.mxu0 %v298
      %307 = vmatprep.subr.bf16.mxu0 0
      %308 = vmatpush1.bf16.msra.mxu0 %v299
      %309 = vmatprep.subr.bf16.mxu0 0
      %310 = vmatpush1.bf16.msra.mxu0 0
      %311 = vmatprep.subr.bf16.mxu0 0
      %312 = vmatpush1.bf16.msra.mxu0 0
      %313 = vmatprep.subr.bf16.mxu0 0
      %314 = vmatpush1.bf16.msra.mxu0 0
      %315 = vmatprep.subr.bf16.mxu0 0
      %316 = vmatpush1.bf16.msra.mxu0 0
      %317 = vmatprep.subr.bf16.mxu0 0
      %318 = vmatpush1.bf16.msra.mxu0 0
      %319 = vmatprep.subr.bf16.mxu0 0
      %320 = vmatpush1.bf16.msra.mxu0 0
      %321 = vmatprep.subr.bf16.mxu0 0
      %322 = vmatpush1.bf16.msra.mxu0 0
      %323 = vmatprep.subr.bf16.mxu0 0
      %324 = vmatpush1.bf16.msra.mxu0 0
      %325 = vmatprep.subr.bf16.mxu0 0
      %326 = vmatpush1.bf16.msra.mxu0 0
      %327 = vmatprep.subr.bf16.mxu0 0
      %328 = vmatpush1.bf16.msra.mxu0 0
      %329 = vmatprep.subr.bf16.mxu0 0
      %330 = vmatpush1.bf16.msra.mxu0 0
      %331 = vmatprep.subr.bf16.mxu0 0
      %332 = vmatpush1.bf16.msra.mxu0 0
      %333 = vmatprep.subr.bf16.mxu0 0
      %334 = vmatpush1.bf16.msra.mxu0 0
      %335 = vmatprep.subr.bf16.mxu0 0
      %336 = vmatpush1.bf16.msra.mxu0 0
      %337 = vmatprep.mubr.bf16.mxu0 0
      %338 = vmatmul.mubr.bf16.gmra.mrb[0].mxu0 %v303
      %v339 = vpop.f32.mrb[0].mxu0
      %v340 = vadd.f32 0.0, %v339
      %v341 = vpop.f32.mrb[0].mxu0
      %v342 = vpop.f32.mrb[0].mxu0
      %v343 = vpop.f32.mrb[0].mxu0
      %344 = vdwg.mxu0
      %s345 = scalar_lea.vmem %s3, 64
      %v346 = vld [vmem:[%s345] sm:$0xf]
      %v347 = vld [vmem:[%s345 + $0x4] sm:$0xf]
      %v348 = vld [vmem:[%s345 + $0x8] sm:$0xf]
      %v349 = vld [vmem:[%s345 + $0xc] sm:$0xf]
      %v354 = vunpack.c.l.b16 %v346
      %v355 = vunpack.c.l.b16 %v347
      %v356 = vunpack.c.l.b16 %v348
      %v357 = vunpack.c.l.b16 %v349
      %v358 = vpack.c.b16 %v355, %v354
      %v359 = vpack.c.b16 %v357, %v356
      %362 = vmatprep.subr.bf16.mxu0 0
      %363 = vmatpush1.bf16.msra.mxu0 %v358
      %364 = vmatprep.subr.bf16.mxu0 0
      %365 = vmatpush1.bf16.msra.mxu0 %v359
      %366 = vmatprep.subr.bf16.mxu0 0
      %367 = vmatpush1.bf16.msra.mxu0 0
      %368 = vmatprep.subr.bf16.mxu0 0
      %369 = vmatpush1.bf16.msra.mxu0 0
      %370 = vmatprep.subr.bf16.mxu0 0
      %371 = vmatpush1.bf16.msra.mxu0 0
      %372 = vmatprep.subr.bf16.mxu0 0
      %373 = vmatpush1.bf16.msra.mxu0 0
      %374 = vmatprep.subr.bf16.mxu0 0
      %375 = vmatpush1.bf16.msra.mxu0 0
      %376 = vmatprep.subr.bf16.mxu0 0
      %377 = vmatpush1.bf16.msra.mxu0 0
      %378 = vmatprep.subr.bf16.mxu0 0
      %379 = vmatpush1.bf16.msra.mxu0 0
      %380 = vmatprep.subr.bf16.mxu0 0
      %381 = vmatpush1.bf16.msra.mxu0 0
      %382 = vmatprep.subr.bf16.mxu0 0
      %383 = vmatpush1.bf16.msra.mxu0 0
      %384 = vmatprep.subr.bf16.mxu0 0
      %385 = vmatpush1.bf16.msra.mxu0 0
      %386 = vmatprep.subr.bf16.mxu0 0
      %387 = vmatpush1.bf16.msra.mxu0 0
      %388 = vmatprep.subr.bf16.mxu0 0
      %389 = vmatpush1.bf16.msra.mxu0 0
      %390 = vmatprep.subr.bf16.mxu0 0
      %391 = vmatpush1.bf16.msra.mxu0 0
      %392 = vmatprep.subr.bf16.mxu0 0
      %393 = vmatpush1.bf16.msra.mxu0 0
      %394 = vmatprep.mubr.bf16.mxu0 0
      %395 = vmatmul.mubr.bf16.gmra.mrb[0].mxu0 %v303
      %v396 = vpop.f32.mrb[0].mxu0
      %v397 = vadd.f32 0.0, %v396
      %v398 = vpop.f32.mrb[0].mxu0
      %v399 = vpop.f32.mrb[0].mxu0
      %v400 = vpop.f32.mrb[0].mxu0
      %401 = vdwg.mxu0
      %s402 = scalar_lea.vmem %s3, 128
      %v403 = vld [vmem:[%s402] sm:$0xf]
      %v404 = vld [vmem:[%s402 + $0x4] sm:$0xf]
      %v405 = vld [vmem:[%s402 + $0x8] sm:$0xf]
      %v406 = vld [vmem:[%s402 + $0xc] sm:$0xf]
      %v411 = vunpack.c.l.b16 %v403
      %v412 = vunpack.c.l.b16 %v404
      %v413 = vunpack.c.l.b16 %v405
      %v414 = vunpack.c.l.b16 %v406
      %v415 = vpack.c.b16 %v412, %v411
      %v416 = vpack.c.b16 %v414, %v413
      %419 = vmatprep.subr.bf16.mxu0 0
      %420 = vmatpush1.bf16.msra.mxu0 %v415
      %421 = vmatprep.subr.bf16.mxu0 0
      %422 = vmatpush1.bf16.msra.mxu0 %v416
      %423 = vmatprep.subr.bf16.mxu0 0
      %424 = vmatpush1.bf16.msra.mxu0 0
      %425 = vmatprep.subr.bf16.mxu0 0
      %426 = vmatpush1.bf16.msra.mxu0 0
      %427 = vmatprep.subr.bf16.mxu0 0
      %428 = vmatpush1.bf16.msra.mxu0 0
      %429 = vmatprep.subr.bf16.mxu0 0
      %430 = vmatpush1.bf16.msra.mxu0 0
      %431 = vmatprep.subr.bf16.mxu0 0
      %432 = vmatpush1.bf16.msra.mxu0 0
      %433 = vmatprep.subr.bf16.mxu0 0
      %434 = vmatpush1.bf16.msra.mxu0 0
      %435 = vmatprep.subr.bf16.mxu0 0
      %436 = vmatpush1.bf16.msra.mxu0 0
      %437 = vmatprep.subr.bf16.mxu0 0
      %438 = vmatpush1.bf16.msra.mxu0 0
      %439 = vmatprep.subr.bf16.mxu0 0
      %440 = vmatpush1.bf16.msra.mxu0 0
      %441 = vmatprep.subr.bf16.mxu0 0
      %442 = vmatpush1.bf16.msra.mxu0 0
      %443 = vmatprep.subr.bf16.mxu0 0
      %444 = vmatpush1.bf16.msra.mxu0 0
      %445 = vmatprep.subr.bf16.mxu0 0
      %446 = vmatpush1.bf16.msra.mxu0 0
      %447 = vmatprep.subr.bf16.mxu0 0
      %448 = vmatpush1.bf16.msra.mxu0 0
      %449 = vmatprep.subr.bf16.mxu0 0
      %450 = vmatpush1.bf16.msra.mxu0 0
      %451 = vmatprep.mubr.bf16.mxu0 0
      %452 = vmatmul.mubr.bf16.gmra.mrb[0].mxu0 %v303
      %v453 = vpop.f32.mrb[0].mxu0
      %v454 = vadd.f32 0.0, %v453
      %v455 = vpop.f32.mrb[0].mxu0
      %v456 = vpop.f32.mrb[0].mxu0
      %v457 = vpop.f32.mrb[0].mxu0
      %458 = vdwg.mxu0
      %v459 = vld [vmem:[%s2] sm:$0xff]
      %vm460 = vcmask 64512
      %v462 = vsel %vm460, %v340, 0
      %v465 = vsel %vm460, %v397, 0
      %467 = vmatprep.subr.mxu0 0.0
      %468 = vmatpush1.xpose.msra.mxu0 %v465
      %469 = vmatprep.subr.mxu0 0.0
      %470 = vmatpush1.xpose.msra.mxu0 0.0
      %471 = vmatprep.subr.mxu0 0.0
      %472 = vmatpush1.xpose.msra.mxu0 0.0
      %473 = vmatprep.subr.mxu0 0.0
      %474 = vmatpush1.xpose.msra.mxu0 0.0
      %475 = vmatprep.subr.mxu0 0.0
      %476 = vmatpush1.xpose.msra.mxu0 0.0
      %477 = vmatprep.subr.mxu0 0.0
      %478 = vmatpush1.xpose.msra.mxu0 0.0
      %479 = vmatprep.subr.mxu0 0.0
      %480 = vmatpush1.xpose.msra.mxu0 0.0
      %481 = vmatprep.subr.mxu0 0.0
      %482 = vmatpush1.xpose.msra.mxu0 0.0
      %483 = vmatprep.subr.mxu0 0.0
      %484 = vmatpush1.xpose.msra.mxu0 0.0
      %485 = vmatprep.subr.mxu0 0.0
      %486 = vmatpush1.xpose.msra.mxu0 0.0
      %487 = vmatprep.subr.mxu0 0.0
      %488 = vmatpush1.xpose.msra.mxu0 0.0
      %489 = vmatprep.subr.mxu0 0.0
      %490 = vmatpush1.xpose.msra.mxu0 0.0
      %491 = vmatprep.subr.mxu0 0.0
      %492 = vmatpush1.xpose.msra.mxu0 0.0
      %493 = vmatprep.subr.mxu0 0.0
      %494 = vmatpush1.xpose.msra.mxu0 0.0
      %495 = vmatprep.subr.mxu0 0.0
      %496 = vmatpush1.xpose.msra.mxu0 0.0
      %497 = vmatprep.subr.mxu0 0.0
      %498 = vmatpush1.xpose.msra.mxu0 0.0
      %499 = vmatprep.subr.mxu0 0.0
      %500 = vmatpush1.xpose.msra.mxu0 0.0
      %501 = vmatprep.subr.mxu0 0.0
      %502 = vmatpush1.xpose.msra.mxu0 0.0
      %503 = vmatprep.subr.mxu0 0.0
      %504 = vmatpush1.xpose.msra.mxu0 0.0
      %505 = vmatprep.subr.mxu0 0.0
      %506 = vmatpush1.xpose.msra.mxu0 0.0
      %507 = vmatprep.subr.mxu0 0.0
      %508 = vmatpush1.xpose.msra.mxu0 0.0
      %509 = vmatprep.subr.mxu0 0.0
      %510 = vmatpush1.xpose.msra.mxu0 0.0
      %511 = vmatprep.subr.mxu0 0.0
      %512 = vmatpush1.xpose.msra.mxu0 0.0
      %513 = vmatprep.subr.mxu0 0.0
      %514 = vmatpush1.xpose.msra.mxu0 0.0
      %515 = vmatprep.subr.mxu0 0.0
      %516 = vmatpush1.xpose.msra.mxu0 0.0
      %517 = vmatprep.subr.mxu0 0.0
      %518 = vmatpush1.xpose.msra.mxu0 0.0
      %519 = vmatprep.subr.mxu0 0.0
      %520 = vmatpush1.xpose.msra.mxu0 0.0
      %521 = vmatprep.subr.mxu0 0.0
      %522 = vmatpush1.xpose.msra.mxu0 0.0
      %523 = vmatprep.subr.mxu0 0.0
      %524 = vmatpush1.xpose.msra.mxu0 0.0
      %525 = vmatprep.subr.mxu0 0.0
      %526 = vmatpush1.xpose.msra.mxu0 0.0
      %527 = vmatprep.subr.mxu0 0.0
      %528 = vmatpush1.xpose.msra.mxu0 0.0
      %529 = vmatprep.subr.mxu0 0.0
      %530 = vmatpush1.xpose.msra.mxu0 0.0
      %531 = vmatprep.mubr.f32.mxu0 0.0
      %532 = vmatmul.mubr.f32.gmra.mrb[0].mxu0 %v462
      %v533 = vpop.f32.mrb[0].mxu0
      %v534 = vadd.f32 %v459, %v533
      %v535 = vpop.f32.mrb[0].mxu0
      %536 = vdwg.mxu0
      %v538 = vlaneseq
      %v539 = vshrl.u32 %v538, 7
      %v540 = vsub.s32 0, %v539
      %v541 = vrot.slane %v285, %v540
      %v543 = vadd.f32 %v534, %v541
      %v544 = vsel %vm460, %v543, -inf
      %545 = vmax.xlane.f32.xlu0 %v544
      %v546 = vpop.xlane.xlu0 %545
      %v547 = vsub.f32 %v543, %v546
      %v548 = vmul.f32 %v547, 1.442695
      %v549 = vpow.pop %v548
      %v550 = vsel %vm460, %v549, 0.0
      %551 = vadd.xlane.f32.xlu0 %v550
      %v552 = vpop.xlane.xlu0 %551
      %v553 = vrcp.pop %v552
      %v554 = vmul.f32 %v549, %v553
      %v556 = vsel %vm460, %v554, 0
      %558 = vmatprep.subr.mxu0 0.0
      %559 = vmatpush1.msra.mxu0 %v454
      %560 = vmatprep.subr.mxu0 0.0
      %561 = vmatpush1.msra.mxu0 0.0
      %562 = vmatprep.subr.mxu0 0.0
      %563 = vmatpush1.msra.mxu0 0.0
      %564 = vmatprep.subr.mxu0 0.0
      %565 = vmatpush1.msra.mxu0 0.0
      %566 = vmatprep.subr.mxu0 0.0
      %567 = vmatpush1.msra.mxu0 0.0
      %568 = vmatprep.subr.mxu0 0.0
      %569 = vmatpush1.msra.mxu0 0.0
      %570 = vmatprep.subr.mxu0 0.0
      %571 = vmatpush1.msra.mxu0 0.0
      %572 = vmatprep.subr.mxu0 0.0
      %573 = vmatpush1.msra.mxu0 0.0
      %574 = vmatprep.subr.mxu0 0.0
      %575 = vmatpush1.msra.mxu0 0.0
      %576 = vmatprep.subr.mxu0 0.0
      %577 = vmatpush1.msra.mxu0 0.0
      %578 = vmatprep.subr.mxu0 0.0
      %579 = vmatpush1.msra.mxu0 0.0
      %580 = vmatprep.subr.mxu0 0.0
      %581 = vmatpush1.msra.mxu0 0.0
      %582 = vmatprep.subr.mxu0 0.0
      %583 = vmatpush1.msra.mxu0 0.0
      %584 = vmatprep.subr.mxu0 0.0
      %585 = vmatpush1.msra.mxu0 0.0
      %586 = vmatprep.subr.mxu0 0.0
      %587 = vmatpush1.msra.mxu0 0.0
      %588 = vmatprep.subr.mxu0 0.0
      %589 = vmatpush1.msra.mxu0 0.0
      %590 = vmatprep.subr.mxu0 0.0
      %591 = vmatpush1.msra.mxu0 0.0
      %592 = vmatprep.subr.mxu0 0.0
      %593 = vmatpush1.msra.mxu0 0.0
      %594 = vmatprep.subr.mxu0 0.0
      %595 = vmatpush1.msra.mxu0 0.0
      %596 = vmatprep.subr.mxu0 0.0
      %597 = vmatpush1.msra.mxu0 0.0
      %598 = vmatprep.subr.mxu0 0.0
      %599 = vmatpush1.msra.mxu0 0.0
      %600 = vmatprep.subr.mxu0 0.0
      %601 = vmatpush1.msra.mxu0 0.0
      %602 = vmatprep.subr.mxu0 0.0
      %603 = vmatpush1.msra.mxu0 0.0
      %604 = vmatprep.subr.mxu0 0.0
      %605 = vmatpush1.msra.mxu0 0.0
      %606 = vmatprep.subr.mxu0 0.0
      %607 = vmatpush1.msra.mxu0 0.0
      %608 = vmatprep.subr.mxu0 0.0
      %609 = vmatpush1.msra.mxu0 0.0
      %610 = vmatprep.subr.mxu0 0.0
      %611 = vmatpush1.msra.mxu0 0.0
      %612 = vmatprep.subr.mxu0 0.0
      %613 = vmatpush1.msra.mxu0 0.0
      %614 = vmatprep.subr.mxu0 0.0
      %615 = vmatpush1.msra.mxu0 0.0
      %616 = vmatprep.subr.mxu0 0.0
      %617 = vmatpush1.msra.mxu0 0.0
      %618 = vmatprep.subr.mxu0 0.0
      %619 = vmatpush1.msra.mxu0 0.0
      %620 = vmatprep.subr.mxu0 0.0
      %621 = vmatpush1.msra.mxu0 0.0
      %622 = vmatprep.mubr.f32.mxu0 0.0
      %623 = vmatmul.mubr.f32.gmra.mrb[0].mxu0 %v556
      %v624 = vpop.f32.mrb[0].mxu0
      %v625 = vadd.f32 0.0, %v624
      %v626 = vpop.f32.mrb[0].mxu0
      %627 = vdwg.mxu0
      %v628 = vpack.c.bf16 %v625, %v625
      %v629 = vld [vmem:[%s4] sm:$0xf]
      %s630 = scalar_lea.vmem %s3, 16
      %v631 = vld [vmem:[%s630] sm:$0xf]
      %v632 = vld [vmem:[%s630 + $0x4] sm:$0xf]
      %v633 = vld [vmem:[%s630 + $0x8] sm:$0xf]
      %v634 = vld [vmem:[%s630 + $0xc] sm:$0xf]
      %v639 = vunpack.c.l.b16 %v631
      %v640 = vunpack.c.l.b16 %v632
      %v641 = vunpack.c.l.b16 %v633
      %v642 = vunpack.c.l.b16 %v634
      %v643 = vpack.c.b16 %v640, %v639
      %v644 = vpack.c.b16 %v642, %v641
      %647 = vmatprep.subr.bf16.mxu0 0
      %648 = vmatpush1.bf16.msra.mxu0 %v643
      %649 = vmatprep.subr.bf16.mxu0 0
      %650 = vmatpush1.bf16.msra.mxu0 %v644
      %651 = vmatprep.subr.bf16.mxu0 0
      %652 = vmatpush1.bf16.msra.mxu0 0
      %653 = vmatprep.subr.bf16.mxu0 0
      %654 = vmatpush1.bf16.msra.mxu0 0
      %655 = vmatprep.subr.bf16.mxu0 0
      %656 = vmatpush1.bf16.msra.mxu0 0
      %657 = vmatprep.subr.bf16.mxu0 0
      %658 = vmatpush1.bf16.msra.mxu0 0
      %659 = vmatprep.subr.bf16.mxu0 0
      %660 = vmatpush1.bf16.msra.mxu0 0
      %661 = vmatprep.subr.bf16.mxu0 0
      %662 = vmatpush1.bf16.msra.mxu0 0
      %663 = vmatprep.subr.bf16.mxu0 0
      %664 = vmatpush1.bf16.msra.mxu0 0
      %665 = vmatprep.subr.bf16.mxu0 0
      %666 = vmatpush1.bf16.msra.mxu0 0
      %667 = vmatprep.subr.bf16.mxu0 0
      %668 = vmatpush1.bf16.msra.mxu0 0
      %669 = vmatprep.subr.bf16.mxu0 0
      %670 = vmatpush1.bf16.msra.mxu0 0
      %671 = vmatprep.subr.bf16.mxu0 0
      %672 = vmatpush1.bf16.msra.mxu0 0
      %673 = vmatprep.subr.bf16.mxu0 0
      %674 = vmatpush1.bf16.msra.mxu0 0
      %675 = vmatprep.subr.bf16.mxu0 0
      %676 = vmatpush1.bf16.msra.mxu0 0
      %677 = vmatprep.subr.bf16.mxu0 0
      %678 = vmatpush1.bf16.msra.mxu0 0
      %679 = vmatprep.mubr.bf16.mxu0 0
      %680 = vmatmul.mubr.bf16.gmra.mrb[0].mxu0 %v303
      %v681 = vpop.f32.mrb[0].mxu0
      %v682 = vadd.f32 0.0, %v681
      %v683 = vpop.f32.mrb[0].mxu0
      %v684 = vpop.f32.mrb[0].mxu0
      %v685 = vpop.f32.mrb[0].mxu0
      %686 = vdwg.mxu0
      %s687 = scalar_lea.vmem %s3, 80
      %v688 = vld [vmem:[%s687] sm:$0xf]
      %v689 = vld [vmem:[%s687 + $0x4] sm:$0xf]
      %v690 = vld [vmem:[%s687 + $0x8] sm:$0xf]
      %v691 = vld [vmem:[%s687 + $0xc] sm:$0xf]
      %v696 = vunpack.c.l.b16 %v688
      %v697 = vunpack.c.l.b16 %v689
      %v698 = vunpack.c.l.b16 %v690
      %v699 = vunpack.c.l.b16 %v691
      %v700 = vpack.c.b16 %v697, %v696
      %v701 = vpack.c.b16 %v699, %v698
      %704 = vmatprep.subr.bf16.mxu0 0
      %705 = vmatpush1.bf16.msra.mxu0 %v700
      %706 = vmatprep.subr.bf16.mxu0 0
      %707 = vmatpush1.bf16.msra.mxu0 %v701
      %708 = vmatprep.subr.bf16.mxu0 0
      %709 = vmatpush1.bf16.msra.mxu0 0
      %710 = vmatprep.subr.bf16.mxu0 0
      %711 = vmatpush1.bf16.msra.mxu0 0
      %712 = vmatprep.subr.bf16.mxu0 0
      %713 = vmatpush1.bf16.msra.mxu0 0
      %714 = vmatprep.subr.bf16.mxu0 0
      %715 = vmatpush1.bf16.msra.mxu0 0
      %716 = vmatprep.subr.bf16.mxu0 0
      %717 = vmatpush1.bf16.msra.mxu0 0
      %718 = vmatprep.subr.bf16.mxu0 0
      %719 = vmatpush1.bf16.msra.mxu0 0
      %720 = vmatprep.subr.bf16.mxu0 0
      %721 = vmatpush1.bf16.msra.mxu0 0
      %722 = vmatprep.subr.bf16.mxu0 0
      %723 = vmatpush1.bf16.msra.mxu0 0
      %724 = vmatprep.subr.bf16.mxu0 0
      %725 = vmatpush1.bf16.msra.mxu0 0
      %726 = vmatprep.subr.bf16.mxu0 0
      %727 = vmatpush1.bf16.msra.mxu0 0
      %728 = vmatprep.subr.bf16.mxu0 0
      %729 = vmatpush1.bf16.msra.mxu0 0
      %730 = vmatprep.subr.bf16.mxu0 0
      %731 = vmatpush1.bf16.msra.mxu0 0
      %732 = vmatprep.subr.bf16.mxu0 0
      %733 = vmatpush1.bf16.msra.mxu0 0
      %734 = vmatprep.subr.bf16.mxu0 0
      %735 = vmatpush1.bf16.msra.mxu0 0
      %736 = vmatprep.mubr.bf16.mxu0 0
      %737 = vmatmul.mubr.bf16.gmra.mrb[0].mxu0 %v303
      %v738 = vpop.f32.mrb[0].mxu0
      %v739 = vadd.f32 0.0, %v738
      %v740 = vpop.f32.mrb[0].mxu0
      %v741 = vpop.f32.mrb[0].mxu0
      %v742 = vpop.f32.mrb[0].mxu0
      %743 = vdwg.mxu0
      %s744 = scalar_lea.vmem %s3, 144
      %v745 = vld [vmem:[%s744] sm:$0xf]
      %v746 = vld [vmem:[%s744 + $0x4] sm:$0xf]
      %v747 = vld [vmem:[%s744 + $0x8] sm:$0xf]
      %v748 = vld [vmem:[%s744 + $0xc] sm:$0xf]
      %v753 = vunpack.c.l.b16 %v745
      %v754 = vunpack.c.l.b16 %v746
      %v755 = vunpack.c.l.b16 %v747
      %v756 = vunpack.c.l.b16 %v748
      %v757 = vpack.c.b16 %v754, %v753
      %v758 = vpack.c.b16 %v756, %v755
      %761 = vmatprep.subr.bf16.mxu0 0
      %762 = vmatpush1.bf16.msra.mxu0 %v757
      %763 = vmatprep.subr.bf16.mxu0 0
      %764 = vmatpush1.bf16.msra.mxu0 %v758
      %765 = vmatprep.subr.bf16.mxu0 0
      %766 = vmatpush1.bf16.msra.mxu0 0
      %767 = vmatprep.subr.bf16.mxu0 0
      %768 = vmatpush1.bf16.msra.mxu0 0
      %769 = vmatprep.subr.bf16.mxu0 0
      %770 = vmatpush1.bf16.msra.mxu0 0
      %771 = vmatprep.subr.bf16.mxu0 0
      %772 = vmatpush1.bf16.msra.mxu0 0
      %773 = vmatprep.subr.bf16.mxu0 0
      %774 = vmatpush1.bf16.msra.mxu0 0
      %775 = vmatprep.subr.bf16.mxu0 0
      %776 = vmatpush1.bf16.msra.mxu0 0
      %777 = vmatprep.subr.bf16.mxu0 0
      %778 = vmatpush1.bf16.msra.mxu0 0
      %779 = vmatprep.subr.bf16.mxu0 0
      %780 = vmatpush1.bf16.msra.mxu0 0
      %781 = vmatprep.subr.bf16.mxu0 0
      %782 = vmatpush1.bf16.msra.mxu0 0
      %783 = vmatprep.subr.bf16.mxu0 0
      %784 = vmatpush1.bf16.msra.mxu0 0
      %785 = vmatprep.subr.bf16.mxu0 0
      %786 = vmatpush1.bf16.msra.mxu0 0
      %787 = vmatprep.subr.bf16.mxu0 0
      %788 = vmatpush1.bf16.msra.mxu0 0
      %789 = vmatprep.subr.bf16.mxu0 0
      %790 = vmatpush1.bf16.msra.mxu0 0
      %791 = vmatprep.subr.bf16.mxu0 0
      %792 = vmatpush1.bf16.msra.mxu0 0
      %793 = vmatprep.mubr.bf16.mxu0 0
      %794 = vmatmul.mubr.bf16.gmra.mrb[0].mxu0 %v303
      %v795 = vpop.f32.mrb[0].mxu0
      %v796 = vadd.f32 0.0, %v795
      %v797 = vpop.f32.mrb[0].mxu0
      %v798 = vpop.f32.mrb[0].mxu0
      %v799 = vpop.f32.mrb[0].mxu0
      %800 = vdwg.mxu0
      %s801 = scalar_lea.vmem %s2, 8
      %v802 = vld [vmem:[%s801] sm:$0xff]
      %v804 = vsel %vm460, %v682, 0
      %v807 = vsel %vm460, %v739, 0
      %809 = vmatprep.subr.mxu0 0.0
      %810 = vmatpush1.xpose.msra.mxu0 %v807
      %811 = vmatprep.subr.mxu0 0.0
      %812 = vmatpush1.xpose.msra.mxu0 0.0
      %813 = vmatprep.subr.mxu0 0.0
      %814 = vmatpush1.xpose.msra.mxu0 0.0
      %815 = vmatprep.subr.mxu0 0.0
      %816 = vmatpush1.xpose.msra.mxu0 0.0
      %817 = vmatprep.subr.mxu0 0.0
      %818 = vmatpush1.xpose.msra.mxu0 0.0
      %819 = vmatprep.subr.mxu0 0.0
      %820 = vmatpush1.xpose.msra.mxu0 0.0
      %821 = vmatprep.subr.mxu0 0.0
      %822 = vmatpush1.xpose.msra.mxu0 0.0
      %823 = vmatprep.subr.mxu0 0.0
      %824 = vmatpush1.xpose.msra.mxu0 0.0
      %825 = vmatprep.subr.mxu0 0.0
      %826 = vmatpush1.xpose.msra.mxu0 0.0
      %827 = vmatprep.subr.mxu0 0.0
      %828 = vmatpush1.xpose.msra.mxu0 0.0
      %829 = vmatprep.subr.mxu0 0.0
      %830 = vmatpush1.xpose.msra.mxu0 0.0
      %831 = vmatprep.subr.mxu0 0.0
      %832 = vmatpush1.xpose.msra.mxu0 0.0
      %833 = vmatprep.subr.mxu0 0.0
      %834 = vmatpush1.xpose.msra.mxu0 0.0
      %835 = vmatprep.subr.mxu0 0.0
      %836 = vmatpush1.xpose.msra.mxu0 0.0
      %837 = vmatprep.subr.mxu0 0.0
      %838 = vmatpush1.xpose.msra.mxu0 0.0
      %839 = vmatprep.subr.mxu0 0.0
      %840 = vmatpush1.xpose.msra.mxu0 0.0
      %841 = vmatprep.subr.mxu0 0.0
      %842 = vmatpush1.xpose.msra.mxu0 0.0
      %843 = vmatprep.subr.mxu0 0.0
      %844 = vmatpush1.xpose.msra.mxu0 0.0
      %845 = vmatprep.subr.mxu0 0.0
      %846 = vmatpush1.xpose.msra.mxu0 0.0
      %847 = vmatprep.subr.mxu0 0.0
      %848 = vmatpush1.xpose.msra.mxu0 0.0
      %849 = vmatprep.subr.mxu0 0.0
      %850 = vmatpush1.xpose.msra.mxu0 0.0
      %851 = vmatprep.subr.mxu0 0.0
      %852 = vmatpush1.xpose.msra.mxu0 0.0
      %853 = vmatprep.subr.mxu0 0.0
      %854 = vmatpush1.xpose.msra.mxu0 0.0
      %855 = vmatprep.subr.mxu0 0.0
      %856 = vmatpush1.xpose.msra.mxu0 0.0
      %857 = vmatprep.subr.mxu0 0.0
      %858 = vmatpush1.xpose.msra.mxu0 0.0
      %859 = vmatprep.subr.mxu0 0.0
      %860 = vmatpush1.xpose.msra.mxu0 0.0
      %861 = vmatprep.subr.mxu0 0.0
      %862 = vmatpush1.xpose.msra.mxu0 0.0
      %863 = vmatprep.subr.mxu0 0.0
      %864 = vmatpush1.xpose.msra.mxu0 0.0
      %865 = vmatprep.subr.mxu0 0.0
      %866 = vmatpush1.xpose.msra.mxu0 0.0
      %867 = vmatprep.subr.mxu0 0.0
      %868 = vmatpush1.xpose.msra.mxu0 0.0
      %869 = vmatprep.subr.mxu0 0.0
      %870 = vmatpush1.xpose.msra.mxu0 0.0
      %871 = vmatprep.subr.mxu0 0.0
      %872 = vmatpush1.xpose.msra.mxu0 0.0
      %873 = vmatprep.mubr.f32.mxu0 0.0
      %874 = vmatmul.mubr.f32.gmra.mrb[0].mxu0 %v804
      %v875 = vpop.f32.mrb[0].mxu0
      %v876 = vadd.f32 %v802, %v875
      %v877 = vpop.f32.mrb[0].mxu0
      %878 = vdwg.mxu0
      %v879 = vadd.f32 %v876, %v541
      %v880 = vsel %vm460, %v879, -inf
      %881 = vmax.xlane.f32.xlu0 %v880
      %v882 = vpop.xlane.xlu0 %881
      %v883 = vsub.f32 %v879, %v882
      %v884 = vmul.f32 %v883, 1.442695
      %v885 = vpow.pop %v884
      %v886 = vsel %vm460, %v885, 0.0
      %887 = vadd.xlane.f32.xlu0 %v886
      %v888 = vpop.xlane.xlu0 %887
      %v889 = vrcp.pop %v888
      %v890 = vmul.f32 %v885, %v889
      %v892 = vsel %vm460, %v890, 0
      %894 = vmatprep.subr.mxu0 0.0
      %895 = vmatpush1.msra.mxu0 %v796
      %896 = vmatprep.subr.mxu0 0.0
      %897 = vmatpush1.msra.mxu0 0.0
      %898 = vmatprep.subr.mxu0 0.0
      %899 = vmatpush1.msra.mxu0 0.0
      %900 = vmatprep.subr.mxu0 0.0
      %901 = vmatpush1.msra.mxu0 0.0
      %902 = vmatprep.subr.mxu0 0.0
      %903 = vmatpush1.msra.mxu0 0.0
      %904 = vmatprep.subr.mxu0 0.0
      %905 = vmatpush1.msra.mxu0 0.0
      %906 = vmatprep.subr.mxu0 0.0
      %907 = vmatpush1.msra.mxu0 0.0
      %908 = vmatprep.subr.mxu0 0.0
      %909 = vmatpush1.msra.mxu0 0.0
      %910 = vmatprep.subr.mxu0 0.0
      %911 = vmatpush1.msra.mxu0 0.0
      %912 = vmatprep.subr.mxu0 0.0
      %913 = vmatpush1.msra.mxu0 0.0
      %914 = vmatprep.subr.mxu0 0.0
      %915 = vmatpush1.msra.mxu0 0.0
      %916 = vmatprep.subr.mxu0 0.0
      %917 = vmatpush1.msra.mxu0 0.0
      %918 = vmatprep.subr.mxu0 0.0
      %919 = vmatpush1.msra.mxu0 0.0
      %920 = vmatprep.subr.mxu0 0.0
      %921 = vmatpush1.msra.mxu0 0.0
      %922 = vmatprep.subr.mxu0 0.0
      %923 = vmatpush1.msra.mxu0 0.0
      %924 = vmatprep.subr.mxu0 0.0
      %925 = vmatpush1.msra.mxu0 0.0
      %926 = vmatprep.subr.mxu0 0.0
      %927 = vmatpush1.msra.mxu0 0.0
      %928 = vmatprep.subr.mxu0 0.0
      %929 = vmatpush1.msra.mxu0 0.0
      %930 = vmatprep.subr.mxu0 0.0
      %931 = vmatpush1.msra.mxu0 0.0
      %932 = vmatprep.subr.mxu0 0.0
      %933 = vmatpush1.msra.mxu0 0.0
      %934 = vmatprep.subr.mxu0 0.0
      %935 = vmatpush1.msra.mxu0 0.0
      %936 = vmatprep.subr.mxu0 0.0
      %937 = vmatpush1.msra.mxu0 0.0
      %938 = vmatprep.subr.mxu0 0.0
      %939 = vmatpush1.msra.mxu0 0.0
      %940 = vmatprep.subr.mxu0 0.0
      %941 = vmatpush1.msra.mxu0 0.0
      %942 = vmatprep.subr.mxu0 0.0
      %943 = vmatpush1.msra.mxu0 0.0
      %944 = vmatprep.subr.mxu0 0.0
      %945 = vmatpush1.msra.mxu0 0.0
      %946 = vmatprep.subr.mxu0 0.0
      %947 = vmatpush1.msra.mxu0 0.0
      %948 = vmatprep.subr.mxu0 0.0
      %949 = vmatpush1.msra.mxu0 0.0
      %950 = vmatprep.subr.mxu0 0.0
      %951 = vmatpush1.msra.mxu0 0.0
      %952 = vmatprep.subr.mxu0 0.0
      %953 = vmatpush1.msra.mxu0 0.0
      %954 = vmatprep.subr.mxu0 0.0
      %955 = vmatpush1.msra.mxu0 0.0
      %956 = vmatprep.subr.mxu0 0.0
      %957 = vmatpush1.msra.mxu0 0.0
      %958 = vmatprep.mubr.f32.mxu0 0.0
      %959 = vmatmul.mubr.f32.gmra.mrb[0].mxu0 %v892
      %v960 = vpop.f32.mrb[0].mxu0
      %v961 = vadd.f32 0.0, %v960
      %v962 = vpop.f32.mrb[0].mxu0
      %963 = vdwg.mxu0
      %v964 = vpack.c.bf16 %v961, %v961
      %s965 = scalar_lea.vmem %s4, 4
      %v966 = vld [vmem:[%s965] sm:$0xf]
      %v968 = vsel %vm460, %v964, 0
      %vm970 = vcmask 1043456
      %v972 = vsel %vm970, %v966, 0
      %974 = vmatprep.subr.bf16.mxu0 0
      %975 = vmatpush1.bf16.msra.mxu0 %v972
      %976 = vmatprep.subr.bf16.mxu0 0
      %977 = vmatpush1.bf16.msra.mxu0 0
      %978 = vmatprep.subr.bf16.mxu0 0
      %979 = vmatpush1.bf16.msra.mxu0 0
      %980 = vmatprep.subr.bf16.mxu0 0
      %981 = vmatpush1.bf16.msra.mxu0 0
      %982 = vmatprep.subr.bf16.mxu0 0
      %983 = vmatpush1.bf16.msra.mxu0 0
      %984 = vmatprep.subr.bf16.mxu0 0
      %985 = vmatpush1.bf16.msra.mxu0 0
      %986 = vmatprep.subr.bf16.mxu0 0
      %987 = vmatpush1.bf16.msra.mxu0 0
      %988 = vmatprep.subr.bf16.mxu0 0
      %989 = vmatpush1.bf16.msra.mxu0 0
      %990 = vmatprep.subr.bf16.mxu0 0
      %991 = vmatpush1.bf16.msra.mxu0 0
      %992 = vmatprep.subr.bf16.mxu0 0
      %993 = vmatpush1.bf16.msra.mxu0 0
      %994 = vmatprep.subr.bf16.mxu0 0
      %995 = vmatpush1.bf16.msra.mxu0 0
      %996 = vmatprep.subr.bf16.mxu0 0
      %997 = vmatpush1.bf16.msra.mxu0 0
      %998 = vmatprep.subr.bf16.mxu0 0
      %999 = vmatpush1.bf16.msra.mxu0 0
      %1000 = vmatprep.subr.bf16.mxu0 0
      %1001 = vmatpush1.bf16.msra.mxu0 0
      %1002 = vmatprep.subr.bf16.mxu0 0
      %1003 = vmatpush1.bf16.msra.mxu0 0
      %1004 = vmatprep.subr.bf16.mxu0 0
      %1005 = vmatpush1.bf16.msra.mxu0 0
      %1006 = vmatprep.mubr.bf16.mxu0 0
      %1007 = vmatmul.mubr.bf16.gmra.mrb[0].mxu0 %v968
      %v1008 = vpop.f32.mrb[0].mxu0
      %v1009 = vadd.f32 0.0, %v1008
      %v1010 = vpop.f32.mrb[0].mxu0
      %v1011 = vpop.f32.mrb[0].mxu0
      %v1012 = vpop.f32.mrb[0].mxu0
      %1013 = vdwg.mxu0
      %v1015 = vsel %vm460, %v628, 0
      %v1018 = vsel %vm970, %v629, 0
      %1020 = vmatprep.subr.bf16.mxu0 0
      %1021 = vmatpush1.bf16.msra.mxu0 %v1018
      %1022 = vmatprep.subr.bf16.mxu0 0
      %1023 = vmatpush1.bf16.msra.mxu0 0
      %1024 = vmatprep.subr.bf16.mxu0 0
      %1025 = vmatpush1.bf16.msra.mxu0 0
      %1026 = vmatprep.subr.bf16.mxu0 0
      %1027 = vmatpush1.bf16.msra.mxu0 0
      %1028 = vmatprep.subr.bf16.mxu0 0
      %1029 = vmatpush1.bf16.msra.mxu0 0
      %1030 = vmatprep.subr.bf16.mxu0 0
      %1031 = vmatpush1.bf16.msra.mxu0 0
      %1032 = vmatprep.subr.bf16.mxu0 0
      %1033 = vmatpush1.bf16.msra.mxu0 0
      %1034 = vmatprep.subr.bf16.mxu0 0
      %1035 = vmatpush1.bf16.msra.mxu0 0
      %1036 = vmatprep.subr.bf16.mxu0 0
      %1037 = vmatpush1.bf16.msra.mxu0 0
      %1038 = vmatprep.subr.bf16.mxu0 0
      %1039 = vmatpush1.bf16.msra.mxu0 0
      %1040 = vmatprep.subr.bf16.mxu0 0
      %1041 = vmatpush1.bf16.msra.mxu0 0
      %1042 = vmatprep.subr.bf16.mxu0 0
      %1043 = vmatpush1.bf16.msra.mxu0 0
      %1044 = vmatprep.subr.bf16.mxu0 0
      %1045 = vmatpush1.bf16.msra.mxu0 0
      %1046 = vmatprep.subr.bf16.mxu0 0
      %1047 = vmatpush1.bf16.msra.mxu0 0
      %1048 = vmatprep.subr.bf16.mxu0 0
      %1049 = vmatpush1.bf16.msra.mxu0 0
      %1050 = vmatprep.subr.bf16.mxu0 0
      %1051 = vmatpush1.bf16.msra.mxu0 0
      %1052 = vmatprep.mubr.bf16.mxu0 0
      %1053 = vmatmul.mubr.bf16.gmra.mrb[0].mxu0 %v1015
      %v1054 = vpop.f32.mrb[0].mxu0
      %v1055 = vadd.f32 %v1009, %v1054
      %v1056 = vpop.f32.mrb[0].mxu0
      %v1057 = vpop.f32.mrb[0].mxu0
      %v1058 = vpop.f32.mrb[0].mxu0
      %1059 = vdwg.mxu0
      %s1060 = scalar_lea.vmem %s3, 32
      %v1061 = vld [vmem:[%s1060] sm:$0xf]
      %v1062 = vld [vmem:[%s1060 + $0x4] sm:$0xf]
      %v1063 = vld [vmem:[%s1060 + $0x8] sm:$0xf]
      %v1064 = vld [vmem:[%s1060 + $0xc] sm:$0xf]
      %v1069 = vunpack.c.l.b16 %v1061
      %v1070 = vunpack.c.l.b16 %v1062
      %v1071 = vunpack.c.l.b16 %v1063
      %v1072 = vunpack.c.l.b16 %v1064
      %v1073 = vpack.c.b16 %v1070, %v1069
      %v1074 = vpack.c.b16 %v1072, %v1071
      %1077 = vmatprep.subr.bf16.mxu0 0
      %1078 = vmatpush1.bf16.msra.mxu0 %v1073
      %1079 = vmatprep.subr.bf16.mxu0 0
      %1080 = vmatpush1.bf16.msra.mxu0 %v1074
      %1081 = vmatprep.subr.bf16.mxu0 0
      %1082 = vmatpush1.bf16.msra.mxu0 0
      %1083 = vmatprep.subr.bf16.mxu0 0
      %1084 = vmatpush1.bf16.msra.mxu0 0
      %1085 = vmatprep.subr.bf16.mxu0 0
      %1086 = vmatpush1.bf16.msra.mxu0 0
      %1087 = vmatprep.subr.bf16.mxu0 0
      %1088 = vmatpush1.bf16.msra.mxu0 0
      %1089 = vmatprep.subr.bf16.mxu0 0
      %1090 = vmatpush1.bf16.msra.mxu0 0
      %1091 = vmatprep.subr.bf16.mxu0 0
      %1092 = vmatpush1.bf16.msra.mxu0 0
      %1093 = vmatprep.subr.bf16.mxu0 0
      %1094 = vmatpush1.bf16.msra.mxu0 0
      %1095 = vmatprep.subr.bf16.mxu0 0
      %1096 = vmatpush1.bf16.msra.mxu0 0
      %1097 = vmatprep.subr.bf16.mxu0 0
      %1098 = vmatpush1.bf16.msra.mxu0 0
      %1099 = vmatprep.subr.bf16.mxu0 0
      %1100 = vmatpush1.bf16.msra.mxu0 0
      %1101 = vmatprep.subr.bf16.mxu0 0
      %1102 = vmatpush1.bf16.msra.mxu0 0
      %1103 = vmatprep.subr.bf16.mxu0 0
      %1104 = vmatpush1.bf16.msra.mxu0 0
      %1105 = vmatprep.subr.bf16.mxu0 0
      %1106 = vmatpush1.bf16.msra.mxu0 0
      %1107 = vmatprep.subr.bf16.mxu0 0
      %1108 = vmatpush1.bf16.msra.mxu0 0
      %1109 = vmatprep.mubr.bf16.mxu0 0
      %1110 = vmatmul.mubr.bf16.gmra.mrb[0].mxu0 %v303
      %v1111 = vpop.f32.mrb[0].mxu0
      %v1112 = vadd.f32 0.0, %v1111
      %v1113 = vpop.f32.mrb[0].mxu0
      %v1114 = vpop.f32.mrb[0].mxu0
      %v1115 = vpop.f32.mrb[0].mxu0
      %1116 = vdwg.mxu0
      %s1117 = scalar_lea.vmem %s3, 96
      %v1118 = vld [vmem:[%s1117] sm:$0xf]
      %v1119 = vld [vmem:[%s1117 + $0x4] sm:$0xf]
      %v1120 = vld [vmem:[%s1117 + $0x8] sm:$0xf]
      %v1121 = vld [vmem:[%s1117 + $0xc] sm:$0xf]
      %v1126 = vunpack.c.l.b16 %v1118
      %v1127 = vunpack.c.l.b16 %v1119
      %v1128 = vunpack.c.l.b16 %v1120
      %v1129 = vunpack.c.l.b16 %v1121
      %v1130 = vpack.c.b16 %v1127, %v1126
      %v1131 = vpack.c.b16 %v1129, %v1128
      %1134 = vmatprep.subr.bf16.mxu0 0
      %1135 = vmatpush1.bf16.msra.mxu0 %v1130
      %1136 = vmatprep.subr.bf16.mxu0 0
      %1137 = vmatpush1.bf16.msra.mxu0 %v1131
      %1138 = vmatprep.subr.bf16.mxu0 0
      %1139 = vmatpush1.bf16.msra.mxu0 0
      %1140 = vmatprep.subr.bf16.mxu0 0
      %1141 = vmatpush1.bf16.msra.mxu0 0
      %1142 = vmatprep.subr.bf16.mxu0 0
      %1143 = vmatpush1.bf16.msra.mxu0 0
      %1144 = vmatprep.subr.bf16.mxu0 0
      %1145 = vmatpush1.bf16.msra.mxu0 0
      %1146 = vmatprep.subr.bf16.mxu0 0
      %1147 = vmatpush1.bf16.msra.mxu0 0
      %1148 = vmatprep.subr.bf16.mxu0 0
      %1149 = vmatpush1.bf16.msra.mxu0 0
      %1150 = vmatprep.subr.bf16.mxu0 0
      %1151 = vmatpush1.bf16.msra.mxu0 0
      %1152 = vmatprep.subr.bf16.mxu0 0
      %1153 = vmatpush1.bf16.msra.mxu0 0
      %1154 = vmatprep.subr.bf16.mxu0 0
      %1155 = vmatpush1.bf16.msra.mxu0 0
      %1156 = vmatprep.subr.bf16.mxu0 0
      %1157 = vmatpush1.bf16.msra.mxu0 0
      %1158 = vmatprep.subr.bf16.mxu0 0
      %1159 = vmatpush1.bf16.msra.mxu0 0
      %1160 = vmatprep.subr.bf16.mxu0 0
      %1161 = vmatpush1.bf16.msra.mxu0 0
      %1162 = vmatprep.subr.bf16.mxu0 0
      %1163 = vmatpush1.bf16.msra.mxu0 0
      %1164 = vmatprep.subr.bf16.mxu0 0
      %1165 = vmatpush1.bf16.msra.mxu0 0
      %1166 = vmatprep.mubr.bf16.mxu0 0
      %1167 = vmatmul.mubr.bf16.gmra.mrb[0].mxu0 %v303
      %v1168 = vpop.f32.mrb[0].mxu0
      %v1169 = vadd.f32 0.0, %v1168
      %v1170 = vpop.f32.mrb[0].mxu0
      %v1171 = vpop.f32.mrb[0].mxu0
      %v1172 = vpop.f32.mrb[0].mxu0
      %1173 = vdwg.mxu0
      %s1174 = scalar_lea.vmem %s3, 160
      %v1175 = vld [vmem:[%s1174] sm:$0xf]
      %v1176 = vld [vmem:[%s1174 + $0x4] sm:$0xf]
      %v1177 = vld [vmem:[%s1174 + $0x8] sm:$0xf]
      %v1178 = vld [vmem:[%s1174 + $0xc] sm:$0xf]
      %v1183 = vunpack.c.l.b16 %v1175
      %v1184 = vunpack.c.l.b16 %v1176
      %v1185 = vunpack.c.l.b16 %v1177
      %v1186 = vunpack.c.l.b16 %v1178
      %v1187 = vpack.c.b16 %v1184, %v1183
      %v1188 = vpack.c.b16 %v1186, %v1185
      %1191 = vmatprep.subr.bf16.mxu0 0
      %1192 = vmatpush1.bf16.msra.mxu0 %v1187
      %1193 = vmatprep.subr.bf16.mxu0 0
      %1194 = vmatpush1.bf16.msra.mxu0 %v1188
      %1195 = vmatprep.subr.bf16.mxu0 0
      %1196 = vmatpush1.bf16.msra.mxu0 0
      %1197 = vmatprep.subr.bf16.mxu0 0
      %1198 = vmatpush1.bf16.msra.mxu0 0
      %1199 = vmatprep.subr.bf16.mxu0 0
      %1200 = vmatpush1.bf16.msra.mxu0 0
      %1201 = vmatprep.subr.bf16.mxu0 0
      %1202 = vmatpush1.bf16.msra.mxu0 0
      %1203 = vmatprep.subr.bf16.mxu0 0
      %1204 = vmatpush1.bf16.msra.mxu0 0
      %1205 = vmatprep.subr.bf16.mxu0 0
      %1206 = vmatpush1.bf16.msra.mxu0 0
      %1207 = vmatprep.subr.bf16.mxu0 0
      %1208 = vmatpush1.bf16.msra.mxu0 0
      %1209 = vmatprep.subr.bf16.mxu0 0
      %1210 = vmatpush1.bf16.msra.mxu0 0
      %1211 = vmatprep.subr.bf16.mxu0 0
      %1212 = vmatpush1.bf16.msra.mxu0 0
      %1213 = vmatprep.subr.bf16.mxu0 0
      %1214 = vmatpush1.bf16.msra.mxu0 0
      %1215 = vmatprep.subr.bf16.mxu0 0
      %1216 = vmatpush1.bf16.msra.mxu0 0
      %1217 = vmatprep.subr.bf16.mxu0 0
      %1218 = vmatpush1.bf16.msra.mxu0 0
      %1219 = vmatprep.subr.bf16.mxu0 0
      %1220 = vmatpush1.bf16.msra.mxu0 0
      %1221 = vmatprep.subr.bf16.mxu0 0
      %1222 = vmatpush1.bf16.msra.mxu0 0
      %1223 = vmatprep.mubr.bf16.mxu0 0
      %1224 = vmatmul.mubr.bf16.gmra.mrb[0].mxu0 %v303
      %v1225 = vpop.f32.mrb[0].mxu0
      %v1226 = vadd.f32 0.0, %v1225
      %v1227 = vpop.f32.mrb[0].mxu0
      %v1228 = vpop.f32.mrb[0].mxu0
      %v1229 = vpop.f32.mrb[0].mxu0
      %1230 = vdwg.mxu0
      %s1231 = scalar_lea.vmem %s2, 16
      %v1232 = vld [vmem:[%s1231] sm:$0xff]
      %v1234 = vsel %vm460, %v1112, 0
      %v1237 = vsel %vm460, %v1169, 0
      %1239 = vmatprep.subr.mxu0 0.0
      %1240 = vmatpush1.xpose.msra.mxu0 %v1237
      %1241 = vmatprep.subr.mxu0 0.0
      %1242 = vmatpush1.xpose.msra.mxu0 0.0
      %1243 = vmatprep.subr.mxu0 0.0
      %1244 = vmatpush1.xpose.msra.mxu0 0.0
      %1245 = vmatprep.subr.mxu0 0.0
      %1246 = vmatpush1.xpose.msra.mxu0 0.0
      %1247 = vmatprep.subr.mxu0 0.0
      %1248 = vmatpush1.xpose.msra.mxu0 0.0
      %1249 = vmatprep.subr.mxu0 0.0
      %1250 = vmatpush1.xpose.msra.mxu0 0.0
      %1251 = vmatprep.subr.mxu0 0.0
      %1252 = vmatpush1.xpose.msra.mxu0 0.0
      %1253 = vmatprep.subr.mxu0 0.0
      %1254 = vmatpush1.xpose.msra.mxu0 0.0
      %1255 = vmatprep.subr.mxu0 0.0
      %1256 = vmatpush1.xpose.msra.mxu0 0.0
      %1257 = vmatprep.subr.mxu0 0.0
      %1258 = vmatpush1.xpose.msra.mxu0 0.0
      %1259 = vmatprep.subr.mxu0 0.0
      %1260 = vmatpush1.xpose.msra.mxu0 0.0
      %1261 = vmatprep.subr.mxu0 0.0
      %1262 = vmatpush1.xpose.msra.mxu0 0.0
      %1263 = vmatprep.subr.mxu0 0.0
      %1264 = vmatpush1.xpose.msra.mxu0 0.0
      %1265 = vmatprep.subr.mxu0 0.0
      %1266 = vmatpush1.xpose.msra.mxu0 0.0
      %1267 = vmatprep.subr.mxu0 0.0
      %1268 = vmatpush1.xpose.msra.mxu0 0.0
      %1269 = vmatprep.subr.mxu0 0.0
      %1270 = vmatpush1.xpose.msra.mxu0 0.0
      %1271 = vmatprep.subr.mxu0 0.0
      %1272 = vmatpush1.xpose.msra.mxu0 0.0
      %1273 = vmatprep.subr.mxu0 0.0
      %1274 = vmatpush1.xpose.msra.mxu0 0.0
      %1275 = vmatprep.subr.mxu0 0.0
      %1276 = vmatpush1.xpose.msra.mxu0 0.0
      %1277 = vmatprep.subr.mxu0 0.0
      %1278 = vmatpush1.xpose.msra.mxu0 0.0
      %1279 = vmatprep.subr.mxu0 0.0
      %1280 = vmatpush1.xpose.msra.mxu0 0.0
      %1281 = vmatprep.subr.mxu0 0.0
      %1282 = vmatpush1.xpose.msra.mxu0 0.0
      %1283 = vmatprep.subr.mxu0 0.0
      %1284 = vmatpush1.xpose.msra.mxu0 0.0
      %1285 = vmatprep.subr.mxu0 0.0
      %1286 = vmatpush1.xpose.msra.mxu0 0.0
      %1287 = vmatprep.subr.mxu0 0.0
      %1288 = vmatpush1.xpose.msra.mxu0 0.0
      %1289 = vmatprep.subr.mxu0 0.0
      %1290 = vmatpush1.xpose.msra.mxu0 0.0
      %1291 = vmatprep.subr.mxu0 0.0
      %1292 = vmatpush1.xpose.msra.mxu0 0.0
      %1293 = vmatprep.subr.mxu0 0.0
      %1294 = vmatpush1.xpose.msra.mxu0 0.0
      %1295 = vmatprep.subr.mxu0 0.0
      %1296 = vmatpush1.xpose.msra.mxu0 0.0
      %1297 = vmatprep.subr.mxu0 0.0
      %1298 = vmatpush1.xpose.msra.mxu0 0.0
      %1299 = vmatprep.subr.mxu0 0.0
      %1300 = vmatpush1.xpose.msra.mxu0 0.0
      %1301 = vmatprep.subr.mxu0 0.0
      %1302 = vmatpush1.xpose.msra.mxu0 0.0
      %1303 = vmatprep.mubr.f32.mxu0 0.0
      %1304 = vmatmul.mubr.f32.gmra.mrb[0].mxu0 %v1234
      %v1305 = vpop.f32.mrb[0].mxu0
      %v1306 = vadd.f32 %v1232, %v1305
      %v1307 = vpop.f32.mrb[0].mxu0
      %1308 = vdwg.mxu0
      %v1309 = vadd.f32 %v1306, %v541
      %v1310 = vsel %vm460, %v1309, -inf
      %1311 = vmax.xlane.f32.xlu0 %v1310
      %v1312 = vpop.xlane.xlu0 %1311
      %v1313 = vsub.f32 %v1309, %v1312
      %v1314 = vmul.f32 %v1313, 1.442695
      %v1315 = vpow.pop %v1314
      %v1316 = vsel %vm460, %v1315, 0.0
      %1317 = vadd.xlane.f32.xlu0 %v1316
      %v1318 = vpop.xlane.xlu0 %1317
      %v1319 = vrcp.pop %v1318
      %v1320 = vmul.f32 %v1315, %v1319
      %v1322 = vsel %vm460, %v1320, 0
      %1324 = vmatprep.subr.mxu0 0.0
      %1325 = vmatpush1.msra.mxu0 %v1226
      %1326 = vmatprep.subr.mxu0 0.0
      %1327 = vmatpush1.msra.mxu0 0.0
      %1328 = vmatprep.subr.mxu0 0.0
      %1329 = vmatpush1.msra.mxu0 0.0
      %1330 = vmatprep.subr.mxu0 0.0
      %1331 = vmatpush1.msra.mxu0 0.0
      %1332 = vmatprep.subr.mxu0 0.0
      %1333 = vmatpush1.msra.mxu0 0.0
      %1334 = vmatprep.subr.mxu0 0.0
      %1335 = vmatpush1.msra.mxu0 0.0
      %1336 = vmatprep.subr.mxu0 0.0
      %1337 = vmatpush1.msra.mxu0 0.0
      %1338 = vmatprep.subr.mxu0 0.0
      %1339 = vmatpush1.msra.mxu0 0.0
      %1340 = vmatprep.subr.mxu0 0.0
      %1341 = vmatpush1.msra.mxu0 0.0
      %1342 = vmatprep.subr.mxu0 0.0
      %1343 = vmatpush1.msra.mxu0 0.0
      %1344 = vmatprep.subr.mxu0 0.0
      %1345 = vmatpush1.msra.mxu0 0.0
      %1346 = vmatprep.subr.mxu0 0.0
      %1347 = vmatpush1.msra.mxu0 0.0
      %1348 = vmatprep.subr.mxu0 0.0
      %1349 = vmatpush1.msra.mxu0 0.0
      %1350 = vmatprep.subr.mxu0 0.0
      %1351 = vmatpush1.msra.mxu0 0.0
      %1352 = vmatprep.subr.mxu0 0.0
      %1353 = vmatpush1.msra.mxu0 0.0
      %1354 = vmatprep.subr.mxu0 0.0
      %1355 = vmatpush1.msra.mxu0 0.0
      %1356 = vmatprep.subr.mxu0 0.0
      %1357 = vmatpush1.msra.mxu0 0.0
      %1358 = vmatprep.subr.mxu0 0.0
      %1359 = vmatpush1.msra.mxu0 0.0
      %1360 = vmatprep.subr.mxu0 0.0
      %1361 = vmatpush1.msra.mxu0 0.0
      %1362 = vmatprep.subr.mxu0 0.0
      %1363 = vmatpush1.msra.mxu0 0.0
      %1364 = vmatprep.subr.mxu0 0.0
      %1365 = vmatpush1.msra.mxu0 0.0
      %1366 = vmatprep.subr.mxu0 0.0
      %1367 = vmatpush1.msra.mxu0 0.0
      %1368 = vmatprep.subr.mxu0 0.0
      %1369 = vmatpush1.msra.mxu0 0.0
      %1370 = vmatprep.subr.mxu0 0.0
      %1371 = vmatpush1.msra.mxu0 0.0
      %1372 = vmatprep.subr.mxu0 0.0
      %1373 = vmatpush1.msra.mxu0 0.0
      %1374 = vmatprep.subr.mxu0 0.0
      %1375 = vmatpush1.msra.mxu0 0.0
      %1376 = vmatprep.subr.mxu0 0.0
      %1377 = vmatpush1.msra.mxu0 0.0
      %1378 = vmatprep.subr.mxu0 0.0
      %1379 = vmatpush1.msra.mxu0 0.0
      %1380 = vmatprep.subr.mxu0 0.0
      %1381 = vmatpush1.msra.mxu0 0.0
      %1382 = vmatprep.subr.mxu0 0.0
      %1383 = vmatpush1.msra.mxu0 0.0
      %1384 = vmatprep.subr.mxu0 0.0
      %1385 = vmatpush1.msra.mxu0 0.0
      %1386 = vmatprep.subr.mxu0 0.0
      %1387 = vmatpush1.msra.mxu0 0.0
      %1388 = vmatprep.mubr.f32.mxu0 0.0
      %1389 = vmatmul.mubr.f32.gmra.mrb[0].mxu0 %v1322
      %v1390 = vpop.f32.mrb[0].mxu0
      %v1391 = vadd.f32 0.0, %v1390
      %v1392 = vpop.f32.mrb[0].mxu0
      %1393 = vdwg.mxu0
      %v1394 = vpack.c.bf16 %v1391, %v1391
      %s1395 = scalar_lea.vmem %s4, 8
      %v1396 = vld [vmem:[%s1395] sm:$0xf]
      %v1398 = vsel %vm460, %v1394, 0
      %v1401 = vsel %vm970, %v1396, 0
      %1403 = vmatprep.subr.bf16.mxu0 0
      %1404 = vmatpush1.bf16.msra.mxu0 %v1401
      %1405 = vmatprep.subr.bf16.mxu0 0
      %1406 = vmatpush1.bf16.msra.mxu0 0
      %1407 = vmatprep.subr.bf16.mxu0 0
      %1408 = vmatpush1.bf16.msra.mxu0 0
      %1409 = vmatprep.subr.bf16.mxu0 0
      %1410 = vmatpush1.bf16.msra.mxu0 0
      %1411 = vmatprep.subr.bf16.mxu0 0
      %1412 = vmatpush1.bf16.msra.mxu0 0
      %1413 = vmatprep.subr.bf16.mxu0 0
      %1414 = vmatpush1.bf16.msra.mxu0 0
      %1415 = vmatprep.subr.bf16.mxu0 0
      %1416 = vmatpush1.bf16.msra.mxu0 0
      %1417 = vmatprep.subr.bf16.mxu0 0
      %1418 = vmatpush1.bf16.msra.mxu0 0
      %1419 = vmatprep.subr.bf16.mxu0 0
      %1420 = vmatpush1.bf16.msra.mxu0 0
      %1421 = vmatprep.subr.bf16.mxu0 0
      %1422 = vmatpush1.bf16.msra.mxu0 0
      %1423 = vmatprep.subr.bf16.mxu0 0
      %1424 = vmatpush1.bf16.msra.mxu0 0
      %1425 = vmatprep.subr.bf16.mxu0 0
      %1426 = vmatpush1.bf16.msra.mxu0 0
      %1427 = vmatprep.subr.bf16.mxu0 0
      %1428 = vmatpush1.bf16.msra.mxu0 0
      %1429 = vmatprep.subr.bf16.mxu0 0
      %1430 = vmatpush1.bf16.msra.mxu0 0
      %1431 = vmatprep.subr.bf16.mxu0 0
      %1432 = vmatpush1.bf16.msra.mxu0 0
      %1433 = vmatprep.subr.bf16.mxu0 0
      %1434 = vmatpush1.bf16.msra.mxu0 0
      %1435 = vmatprep.mubr.bf16.mxu0 0
      %1436 = vmatmul.mubr.bf16.gmra.mrb[0].mxu0 %v1398
      %v1437 = vpop.f32.mrb[0].mxu0
      %v1438 = vadd.f32 0.0, %v1437
      %v1439 = vpop.f32.mrb[0].mxu0
      %v1440 = vpop.f32.mrb[0].mxu0
      %v1441 = vpop.f32.mrb[0].mxu0
      %1442 = vdwg.mxu0
      %v1443 = vadd.f32 %v1055, %v1438
      %s1444 = scalar_lea.vmem %s3, 48
      %v1445 = vld [vmem:[%s1444] sm:$0xf]
      %v1446 = vld [vmem:[%s1444 + $0x4] sm:$0xf]
      %v1447 = vld [vmem:[%s1444 + $0x8] sm:$0xf]
      %v1448 = vld [vmem:[%s1444 + $0xc] sm:$0xf]
      %v1453 = vunpack.c.l.b16 %v1445
      %v1454 = vunpack.c.l.b16 %v1446
      %v1455 = vunpack.c.l.b16 %v1447
      %v1456 = vunpack.c.l.b16 %v1448
      %v1457 = vpack.c.b16 %v1454, %v1453
      %v1458 = vpack.c.b16 %v1456, %v1455
      %1461 = vmatprep.subr.bf16.mxu0 0
      %1462 = vmatpush1.bf16.msra.mxu0 %v1457
      %1463 = vmatprep.subr.bf16.mxu0 0
      %1464 = vmatpush1.bf16.msra.mxu0 %v1458
      %1465 = vmatprep.subr.bf16.mxu0 0
      %1466 = vmatpush1.bf16.msra.mxu0 0
      %1467 = vmatprep.subr.bf16.mxu0 0
      %1468 = vmatpush1.bf16.msra.mxu0 0
      %1469 = vmatprep.subr.bf16.mxu0 0
      %1470 = vmatpush1.bf16.msra.mxu0 0
      %1471 = vmatprep.subr.bf16.mxu0 0
      %1472 = vmatpush1.bf16.msra.mxu0 0
      %1473 = vmatprep.subr.bf16.mxu0 0
      %1474 = vmatpush1.bf16.msra.mxu0 0
      %1475 = vmatprep.subr.bf16.mxu0 0
      %1476 = vmatpush1.bf16.msra.mxu0 0
      %1477 = vmatprep.subr.bf16.mxu0 0
      %1478 = vmatpush1.bf16.msra.mxu0 0
      %1479 = vmatprep.subr.bf16.mxu0 0
      %1480 = vmatpush1.bf16.msra.mxu0 0
      %1481 = vmatprep.subr.bf16.mxu0 0
      %1482 = vmatpush1.bf16.msra.mxu0 0
      %1483 = vmatprep.subr.bf16.mxu0 0
      %1484 = vmatpush1.bf16.msra.mxu0 0
      %1485 = vmatprep.subr.bf16.mxu0 0
      %1486 = vmatpush1.bf16.msra.mxu0 0
      %1487 = vmatprep.subr.bf16.mxu0 0
      %1488 = vmatpush1.bf16.msra.mxu0 0
      %1489 = vmatprep.subr.bf16.mxu0 0
      %1490 = vmatpush1.bf16.msra.mxu0 0
      %1491 = vmatprep.subr.bf16.mxu0 0
      %1492 = vmatpush1.bf16.msra.mxu0 0
      %1493 = vmatprep.mubr.bf16.mxu0 0
      %1494 = vmatmul.mubr.bf16.gmra.mrb[0].mxu0 %v303
      %v1495 = vpop.f32.mrb[0].mxu0
      %v1496 = vadd.f32 0.0, %v1495
      %v1497 = vpop.f32.mrb[0].mxu0
      %v1498 = vpop.f32.mrb[0].mxu0
      %v1499 = vpop.f32.mrb[0].mxu0
      %1500 = vdwg.mxu0
      %s1501 = scalar_lea.vmem %s3, 112
      %v1502 = vld [vmem:[%s1501] sm:$0xf]
      %v1503 = vld [vmem:[%s1501 + $0x4] sm:$0xf]
      %v1504 = vld [vmem:[%s1501 + $0x8] sm:$0xf]
      %v1505 = vld [vmem:[%s1501 + $0xc] sm:$0xf]
      %v1510 = vunpack.c.l.b16 %v1502
      %v1511 = vunpack.c.l.b16 %v1503
      %v1512 = vunpack.c.l.b16 %v1504
      %v1513 = vunpack.c.l.b16 %v1505
      %v1514 = vpack.c.b16 %v1511, %v1510
      %v1515 = vpack.c.b16 %v1513, %v1512
      %1518 = vmatprep.subr.bf16.mxu0 0
      %1519 = vmatpush1.bf16.msra.mxu0 %v1514
      %1520 = vmatprep.subr.bf16.mxu0 0
      %1521 = vmatpush1.bf16.msra.mxu0 %v1515
      %1522 = vmatprep.subr.bf16.mxu0 0
      %1523 = vmatpush1.bf16.msra.mxu0 0
      %1524 = vmatprep.subr.bf16.mxu0 0
      %1525 = vmatpush1.bf16.msra.mxu0 0
      %1526 = vmatprep.subr.bf16.mxu0 0
      %1527 = vmatpush1.bf16.msra.mxu0 0
      %1528 = vmatprep.subr.bf16.mxu0 0
      %1529 = vmatpush1.bf16.msra.mxu0 0
      %1530 = vmatprep.subr.bf16.mxu0 0
      %1531 = vmatpush1.bf16.msra.mxu0 0
      %1532 = vmatprep.subr.bf16.mxu0 0
      %1533 = vmatpush1.bf16.msra.mxu0 0
      %1534 = vmatprep.subr.bf16.mxu0 0
      %1535 = vmatpush1.bf16.msra.mxu0 0
      %1536 = vmatprep.subr.bf16.mxu0 0
      %1537 = vmatpush1.bf16.msra.mxu0 0
      %1538 = vmatprep.subr.bf16.mxu0 0
      %1539 = vmatpush1.bf16.msra.mxu0 0
      %1540 = vmatprep.subr.bf16.mxu0 0
      %1541 = vmatpush1.bf16.msra.mxu0 0
      %1542 = vmatprep.subr.bf16.mxu0 0
      %1543 = vmatpush1.bf16.msra.mxu0 0
      %1544 = vmatprep.subr.bf16.mxu0 0
      %1545 = vmatpush1.bf16.msra.mxu0 0
      %1546 = vmatprep.subr.bf16.mxu0 0
      %1547 = vmatpush1.bf16.msra.mxu0 0
      %1548 = vmatprep.subr.bf16.mxu0 0
      %1549 = vmatpush1.bf16.msra.mxu0 0
      %1550 = vmatprep.mubr.bf16.mxu0 0
      %1551 = vmatmul.mubr.bf16.gmra.mrb[0].mxu0 %v303
      %v1552 = vpop.f32.mrb[0].mxu0
      %v1553 = vadd.f32 0.0, %v1552
      %v1554 = vpop.f32.mrb[0].mxu0
      %v1555 = vpop.f32.mrb[0].mxu0
      %v1556 = vpop.f32.mrb[0].mxu0
      %1557 = vdwg.mxu0
      %s1558 = scalar_lea.vmem %s3, 176
      %v1559 = vld [vmem:[%s1558] sm:$0xf]
      %v1560 = vld [vmem:[%s1558 + $0x4] sm:$0xf]
      %v1561 = vld [vmem:[%s1558 + $0x8] sm:$0xf]
      %v1562 = vld [vmem:[%s1558 + $0xc] sm:$0xf]
      %v1567 = vunpack.c.l.b16 %v1559
      %v1568 = vunpack.c.l.b16 %v1560
      %v1569 = vunpack.c.l.b16 %v1561
      %v1570 = vunpack.c.l.b16 %v1562
      %v1571 = vpack.c.b16 %v1568, %v1567
      %v1572 = vpack.c.b16 %v1570, %v1569
      %1575 = vmatprep.subr.bf16.mxu0 0
      %1576 = vmatpush1.bf16.msra.mxu0 %v1571
      %1577 = vmatprep.subr.bf16.mxu0 0
      %1578 = vmatpush1.bf16.msra.mxu0 %v1572
      %1579 = vmatprep.subr.bf16.mxu0 0
      %1580 = vmatpush1.bf16.msra.mxu0 0
      %1581 = vmatprep.subr.bf16.mxu0 0
      %1582 = vmatpush1.bf16.msra.mxu0 0
      %1583 = vmatprep.subr.bf16.mxu0 0
      %1584 = vmatpush1.bf16.msra.mxu0 0
      %1585 = vmatprep.subr.bf16.mxu0 0
      %1586 = vmatpush1.bf16.msra.mxu0 0
      %1587 = vmatprep.subr.bf16.mxu0 0
      %1588 = vmatpush1.bf16.msra.mxu0 0
      %1589 = vmatprep.subr.bf16.mxu0 0
      %1590 = vmatpush1.bf16.msra.mxu0 0
      %1591 = vmatprep.subr.bf16.mxu0 0
      %1592 = vmatpush1.bf16.msra.mxu0 0
      %1593 = vmatprep.subr.bf16.mxu0 0
      %1594 = vmatpush1.bf16.msra.mxu0 0
      %1595 = vmatprep.subr.bf16.mxu0 0
      %1596 = vmatpush1.bf16.msra.mxu0 0
      %1597 = vmatprep.subr.bf16.mxu0 0
      %1598 = vmatpush1.bf16.msra.mxu0 0
      %1599 = vmatprep.subr.bf16.mxu0 0
      %1600 = vmatpush1.bf16.msra.mxu0 0
      %1601 = vmatprep.subr.bf16.mxu0 0
      %1602 = vmatpush1.bf16.msra.mxu0 0
      %1603 = vmatprep.subr.bf16.mxu0 0
      %1604 = vmatpush1.bf16.msra.mxu0 0
      %1605 = vmatprep.subr.bf16.mxu0 0
      %1606 = vmatpush1.bf16.msra.mxu0 0
      %1607 = vmatprep.mubr.bf16.mxu0 0
      %1608 = vmatmul.mubr.bf16.gmra.mrb[0].mxu0 %v303
      %v1609 = vpop.f32.mrb[0].mxu0
      %v1610 = vadd.f32 0.0, %v1609
      %v1611 = vpop.f32.mrb[0].mxu0
      %v1612 = vpop.f32.mrb[0].mxu0
      %v1613 = vpop.f32.mrb[0].mxu0
      %1614 = vdwg.mxu0
      %s1615 = scalar_lea.vmem %s2, 24
      %v1616 = vld [vmem:[%s1615] sm:$0xff]
      %v1618 = vsel %vm460, %v1496, 0
      %v1621 = vsel %vm460, %v1553, 0
      %1623 = vmatprep.subr.mxu0 0.0
      %1624 = vmatpush1.xpose.msra.mxu0 %v1621
      %1625 = vmatprep.subr.mxu0 0.0
      %1626 = vmatpush1.xpose.msra.mxu0 0.0
      %1627 = vmatprep.subr.mxu0 0.0
      %1628 = vmatpush1.xpose.msra.mxu0 0.0
      %1629 = vmatprep.subr.mxu0 0.0
      %1630 = vmatpush1.xpose.msra.mxu0 0.0
      %1631 = vmatprep.subr.mxu0 0.0
      %1632 = vmatpush1.xpose.msra.mxu0 0.0
      %1633 = vmatprep.subr.mxu0 0.0
      %1634 = vmatpush1.xpose.msra.mxu0 0.0
      %1635 = vmatprep.subr.mxu0 0.0
      %1636 = vmatpush1.xpose.msra.mxu0 0.0
      %1637 = vmatprep.subr.mxu0 0.0
      %1638 = vmatpush1.xpose.msra.mxu0 0.0
      %1639 = vmatprep.subr.mxu0 0.0
      %1640 = vmatpush1.xpose.msra.mxu0 0.0
      %1641 = vmatprep.subr.mxu0 0.0
      %1642 = vmatpush1.xpose.msra.mxu0 0.0
      %1643 = vmatprep.subr.mxu0 0.0
      %1644 = vmatpush1.xpose.msra.mxu0 0.0
      %1645 = vmatprep.subr.mxu0 0.0
      %1646 = vmatpush1.xpose.msra.mxu0 0.0
      %1647 = vmatprep.subr.mxu0 0.0
      %1648 = vmatpush1.xpose.msra.mxu0 0.0
      %1649 = vmatprep.subr.mxu0 0.0
      %1650 = vmatpush1.xpose.msra.mxu0 0.0
      %1651 = vmatprep.subr.mxu0 0.0
      %1652 = vmatpush1.xpose.msra.mxu0 0.0
      %1653 = vmatprep.subr.mxu0 0.0
      %1654 = vmatpush1.xpose.msra.mxu0 0.0
      %1655 = vmatprep.subr.mxu0 0.0
      %1656 = vmatpush1.xpose.msra.mxu0 0.0
      %1657 = vmatprep.subr.mxu0 0.0
      %1658 = vmatpush1.xpose.msra.mxu0 0.0
      %1659 = vmatprep.subr.mxu0 0.0
      %1660 = vmatpush1.xpose.msra.mxu0 0.0
      %1661 = vmatprep.subr.mxu0 0.0
      %1662 = vmatpush1.xpose.msra.mxu0 0.0
      %1663 = vmatprep.subr.mxu0 0.0
      %1664 = vmatpush1.xpose.msra.mxu0 0.0
      %1665 = vmatprep.subr.mxu0 0.0
      %1666 = vmatpush1.xpose.msra.mxu0 0.0
      %1667 = vmatprep.subr.mxu0 0.0
      %1668 = vmatpush1.xpose.msra.mxu0 0.0
      %1669 = vmatprep.subr.mxu0 0.0
      %1670 = vmatpush1.xpose.msra.mxu0 0.0
      %1671 = vmatprep.subr.mxu0 0.0
      %1672 = vmatpush1.xpose.msra.mxu0 0.0
      %1673 = vmatprep.subr.mxu0 0.0
      %1674 = vmatpush1.xpose.msra.mxu0 0.0
      %1675 = vmatprep.subr.mxu0 0.0
      %1676 = vmatpush1.xpose.msra.mxu0 0.0
      %1677 = vmatprep.subr.mxu0 0.0
      %1678 = vmatpush1.xpose.msra.mxu0 0.0
      %1679 = vmatprep.subr.mxu0 0.0
      %1680 = vmatpush1.xpose.msra.mxu0 0.0
      %1681 = vmatprep.subr.mxu0 0.0
      %1682 = vmatpush1.xpose.msra.mxu0 0.0
      %1683 = vmatprep.subr.mxu0 0.0
      %1684 = vmatpush1.xpose.msra.mxu0 0.0
      %1685 = vmatprep.subr.mxu0 0.0
      %1686 = vmatpush1.xpose.msra.mxu0 0.0
      %1687 = vmatprep.mubr.f32.mxu0 0.0
      %1688 = vmatmul.mubr.f32.gmra.mrb[0].mxu0 %v1618
      %v1689 = vpop.f32.mrb[0].mxu0
      %v1690 = vadd.f32 %v1616, %v1689
      %v1691 = vpop.f32.mrb[0].mxu0
      %1692 = vdwg.mxu0
      %v1693 = vadd.f32 %v1690, %v541
      %v1694 = vsel %vm460, %v1693, -inf
      %1695 = vmax.xlane.f32.xlu0 %v1694
      %v1696 = vpop.xlane.xlu0 %1695
      %v1697 = vsub.f32 %v1693, %v1696
      %v1698 = vmul.f32 %v1697, 1.442695
      %v1699 = vpow.pop %v1698
      %v1700 = vsel %vm460, %v1699, 0.0
      %1701 = vadd.xlane.f32.xlu0 %v1700
      %v1702 = vpop.xlane.xlu0 %1701
      %v1703 = vrcp.pop %v1702
      %v1704 = vmul.f32 %v1699, %v1703
      %v1706 = vsel %vm460, %v1704, 0
      %1708 = vmatprep.subr.mxu0 0.0
      %1709 = vmatpush1.msra.mxu0 %v1610
      %1710 = vmatprep.subr.mxu0 0.0
      %1711 = vmatpush1.msra.mxu0 0.0
      %1712 = vmatprep.subr.mxu0 0.0
      %1713 = vmatpush1.msra.mxu0 0.0
      %1714 = vmatprep.subr.mxu0 0.0
      %1715 = vmatpush1.msra.mxu0 0.0
      %1716 = vmatprep.subr.mxu0 0.0
      %1717 = vmatpush1.msra.mxu0 0.0
      %1718 = vmatprep.subr.mxu0 0.0
      %1719 = vmatpush1.msra.mxu0 0.0
      %1720 = vmatprep.subr.mxu0 0.0
      %1721 = vmatpush1.msra.mxu0 0.0
      %1722 = vmatprep.subr.mxu0 0.0
      %1723 = vmatpush1.msra.mxu0 0.0
      %1724 = vmatprep.subr.mxu0 0.0
      %1725 = vmatpush1.msra.mxu0 0.0
      %1726 = vmatprep.subr.mxu0 0.0
      %1727 = vmatpush1.msra.mxu0 0.0
      %1728 = vmatprep.subr.mxu0 0.0
      %1729 = vmatpush1.msra.mxu0 0.0
      %1730 = vmatprep.subr.mxu0 0.0
      %1731 = vmatpush1.msra.mxu0 0.0
      %1732 = vmatprep.subr.mxu0 0.0
      %1733 = vmatpush1.msra.mxu0 0.0
      %1734 = vmatprep.subr.mxu0 0.0
      %1735 = vmatpush1.msra.mxu0 0.0
      %1736 = vmatprep.subr.mxu0 0.0
      %1737 = vmatpush1.msra.mxu0 0.0
      %1738 = vmatprep.subr.mxu0 0.0
      %1739 = vmatpush1.msra.mxu0 0.0
      %1740 = vmatprep.subr.mxu0 0.0
      %1741 = vmatpush1.msra.mxu0 0.0
      %1742 = vmatprep.subr.mxu0 0.0
      %1743 = vmatpush1.msra.mxu0 0.0
      %1744 = vmatprep.subr.mxu0 0.0
      %1745 = vmatpush1.msra.mxu0 0.0
      %1746 = vmatprep.subr.mxu0 0.0
      %1747 = vmatpush1.msra.mxu0 0.0
      %1748 = vmatprep.subr.mxu0 0.0
      %1749 = vmatpush1.msra.mxu0 0.0
      %1750 = vmatprep.subr.mxu0 0.0
      %1751 = vmatpush1.msra.mxu0 0.0
      %1752 = vmatprep.subr.mxu0 0.0
      %1753 = vmatpush1.msra.mxu0 0.0
      %1754 = vmatprep.subr.mxu0 0.0
      %1755 = vmatpush1.msra.mxu0 0.0
      %1756 = vmatprep.subr.mxu0 0.0
      %1757 = vmatpush1.msra.mxu0 0.0
      %1758 = vmatprep.subr.mxu0 0.0
      %1759 = vmatpush1.msra.mxu0 0.0
      %1760 = vmatprep.subr.mxu0 0.0
      %1761 = vmatpush1.msra.mxu0 0.0
      %1762 = vmatprep.subr.mxu0 0.0
      %1763 = vmatpush1.msra.mxu0 0.0
      %1764 = vmatprep.subr.mxu0 0.0
      %1765 = vmatpush1.msra.mxu0 0.0
      %1766 = vmatprep.subr.mxu0 0.0
      %1767 = vmatpush1.msra.mxu0 0.0
      %1768 = vmatprep.subr.mxu0 0.0
      %1769 = vmatpush1.msra.mxu0 0.0
      %1770 = vmatprep.subr.mxu0 0.0
      %1771 = vmatpush1.msra.mxu0 0.0
      %1772 = vmatprep.mubr.f32.mxu0 0.0
      %1773 = vmatmul.mubr.f32.gmra.mrb[0].mxu0 %v1706
      %v1774 = vpop.f32.mrb[0].mxu0
      %v1775 = vadd.f32 0.0, %v1774
      %v1776 = vpop.f32.mrb[0].mxu0
      %1777 = vdwg.mxu0
      %v1778 = vpack.c.bf16 %v1775, %v1775
      %s1779 = scalar_lea.vmem %s4, 12
      %v1780 = vld [vmem:[%s1779] sm:$0xf]
      %v1782 = vsel %vm460, %v1778, 0
      %v1785 = vsel %vm970, %v1780, 0
      %1787 = vmatprep.subr.bf16.mxu0 0
      %1788 = vmatpush1.bf16.msra.mxu0 %v1785
      %1789 = vmatprep.subr.bf16.mxu0 0
      %1790 = vmatpush1.bf16.msra.mxu0 0
      %1791 = vmatprep.subr.bf16.mxu0 0
      %1792 = vmatpush1.bf16.msra.mxu0 0
      %1793 = vmatprep.subr.bf16.mxu0 0
      %1794 = vmatpush1.bf16.msra.mxu0 0
      %1795 = vmatprep.subr.bf16.mxu0 0
      %1796 = vmatpush1.bf16.msra.mxu0 0
      %1797 = vmatprep.subr.bf16.mxu0 0
      %1798 = vmatpush1.bf16.msra.mxu0 0
      %1799 = vmatprep.subr.bf16.mxu0 0
      %1800 = vmatpush1.bf16.msra.mxu0 0
      %1801 = vmatprep.subr.bf16.mxu0 0
      %1802 = vmatpush1.bf16.msra.mxu0 0
      %1803 = vmatprep.subr.bf16.mxu0 0
      %1804 = vmatpush1.bf16.msra.mxu0 0
      %1805 = vmatprep.subr.bf16.mxu0 0
      %1806 = vmatpush1.bf16.msra.mxu0 0
      %1807 = vmatprep.subr.bf16.mxu0 0
      %1808 = vmatpush1.bf16.msra.mxu0 0
      %1809 = vmatprep.subr.bf16.mxu0 0
      %1810 = vmatpush1.bf16.msra.mxu0 0
      %1811 = vmatprep.subr.bf16.mxu0 0
      %1812 = vmatpush1.bf16.msra.mxu0 0
      %1813 = vmatprep.subr.bf16.mxu0 0
      %1814 = vmatpush1.bf16.msra.mxu0 0
      %1815 = vmatprep.subr.bf16.mxu0 0
      %1816 = vmatpush1.bf16.msra.mxu0 0
      %1817 = vmatprep.subr.bf16.mxu0 0
      %1818 = vmatpush1.bf16.msra.mxu0 0
      %1819 = vmatprep.mubr.bf16.mxu0 0
      %1820 = vmatmul.mubr.bf16.gmra.mrb[0].mxu0 %v1782
      %v1821 = vpop.f32.mrb[0].mxu0
      %v1822 = vadd.f32 0.0, %v1821
      %v1823 = vpop.f32.mrb[0].mxu0
      %v1824 = vpop.f32.mrb[0].mxu0
      %v1825 = vpop.f32.mrb[0].mxu0
      %1826 = vdwg.mxu0
      %v1827 = vadd.f32 %v1443, %v1822
      %v1828 = vadd.f32 %v263, %v1827
      %v1829 = vpack.c.bf16 %v1828, %v1828
      %vm1830 = vcmask 257024
      %1831 = vst.msk [vmem:[%s260] sm:$0xf] %vm1830, %v1829
      %p1832 = scmp.lt.s32.totalorder %s17, 1
      %s1833 = scalar_select %p1832, %s17, 1
      %s1834 = smul.addr %s1833, 4
      %s1835 = scalar_lea.vmem %s6, %s1834
      // Predicated region
      $region45: #{t5_encoder_forward.5} parent=43 // pred_check
        %p1836 = pneg %p171
      $region46: #{t5_encoder_forward.5} parent=43 // pred_check_branch
        %1838 = sbr.rel (%p1836) target = $region48
      $region47: #{t5_encoder_forward.5} parent=43 // pred_region
        _
      $region48: #{t5_encoder_forward.5} parent=43 // pred_fallthru
        _
    $region44: #{t5_encoder_forward.5} parent=5 // pred_fallthru
      _
    %p1839 = scmp.le.s32.totalorder 2, %s12
    // Predicated region
    $region49: #{t5_encoder_forward.5} parent=5 // pred_check
      %p1840 = pneg %p1839
    $region50: #{t5_encoder_forward.5} parent=5 // pred_check_branch
      %1842 = sbr.rel (%p1840) target = $region52
    $region51: #{t5_encoder_forward.5} parent=5 // pred_region
      %s1843 = ssub.s32 %s12, 2
      // Predicated region
      $region53: #{t5_encoder_forward.5} parent=51 // pred_check
        %p1844 = pneg %p177
      $region54: #{t5_encoder_forward.5} parent=51 // pred_check_branch
        %1846 = sbr.rel (%p1844) target = $region56
      $region55: #{t5_encoder_forward.5} parent=51 // pred_region
        %p1847 = scmp.lt.s32.totalorder %s18, 1
        %s1848 = scalar_select %p1847, %s18, 1
        %s1849 = smul.addr %s1848, 4
        %s1850 = scalar_lea.vmem %s6, %s1849
      $region56: #{t5_encoder_forward.5} parent=51 // pred_fallthru
        _
    $region52: #{t5_encoder_forward.5} parent=5 // pred_fallthru
      _
  $region6: #{t5_encoder_forward.5} parent=0 // loop_footer
    %s16 = sadd.s32 1, %s12
  $region7: #{t5_encoder_forward.5} parent=0 // loop_footer_branch
    %11 = sbr.rel target = $region3
  $region8: #{t5_encoder_forward.5} parent=0 // loop_exit
    _

</llo_original>
